<compile_context>
chip_gen: v6e
topology: v6e:2x2x1
jax: 0.10.0
libtpu: 0.0.40
codegen_flags: <defaults>
</compile_context>

<pallas_src>
import math
import functools

import jax
import jax.numpy as jnp
import numpy as np
from jax.experimental import pallas as pl
from jax.experimental.pallas import tpu as pltpu


def _global_attention_kernel(
    qd_ref, md_ref, qm_ref, mrow_ref,
    wq_ref, wkv_ref, wg_ref, bg_ref, wo_ref, bo_ref,
    o_ref,
    *, num_head, key_dim, value_dim,
):
    f32 = jnp.float32
    H, kd, vd = num_head, key_dim, value_dim
    Bb, Q, Dk = qd_ref.shape
    _, K, Dv = md_ref.shape
    O = o_ref.shape[2]
    # bf16 activations/weights -> bf16 MXU operands; f32 path -> no-op casts.
    mxu_dt = jnp.bfloat16 if wo_ref.dtype == jnp.bfloat16 else f32

    qd = qd_ref[...]                                            # [Bb, Q, Dk]
    qm = qm_ref[...].astype(f32)                                # [Bb, Q, Dk] (bf16 in HBM)

    # ---- big fused projections over the whole batch block (free reshapes) ----
    qd2 = qd.reshape(Bb * Q, Dk)                                # merge leading/sublane dims
    md2 = md_ref[...].reshape(Bb * K, Dv)
    gate = jax.nn.sigmoid(
        jnp.dot(qd2, wg_ref[...], preferred_element_type=f32) + bg_ref[...])   # [Bb*Q, Dv]
    kv = jnp.dot(md2, wkv_ref[...], preferred_element_type=f32)                # [Bb*K, kd+vd]
    kv3 = kv.reshape(Bb, K, kd + vd)
    k3 = kv3[:, :, :kd].astype(mxu_dt)                          # [Bb, K, kd]
    v3 = kv3[:, :, kd:].astype(mxu_dt)                          # [Bb, K, vd]

    # ---- mask_mean(q_mask, q_data, dims=[1]) for the whole block at once ----
    num = jnp.sum(qm * qd.astype(f32), axis=1)                  # [Bb, Dk]
    den = jnp.sum(qm, axis=1) + 1e-10                           # [Bb, Dk]
    q_avg = num * pl.reciprocal(den)                            # exact reciprocal

    # 1/sqrt(kd) is folded into wq wrapper-side.
    q3 = jnp.dot(q_avg.astype(mxu_dt), wq_ref[...],
                 preferred_element_type=f32).reshape(Bb, H, kd).astype(mxu_dt)

    # ---- all-heads, all-batch attention core ----
    bias3 = 1e9 * (mrow_ref[...].astype(f32) - 1.0)             # [Bb, 1, K]
    logits = jnp.einsum('bhd,bkd->bhk', q3, k3,
                        preferred_element_type=f32) + bias3     # [Bb, H, K]
    m = jnp.max(logits, axis=-1, keepdims=True)
    p = jnp.exp(logits - m)
    w = p * pl.reciprocal(jnp.sum(p, axis=-1, keepdims=True), approx=True)
    wavg = jnp.einsum('bhk,bkd->bhd', w.astype(mxu_dt), v3,
                      preferred_element_type=f32)               # [Bb, H, vd]

    # ---- gate, output projection, single store ----
    gated = gate.reshape(Bb, Q, Dv) * wavg.reshape(Bb, 1, Dv)   # [Bb, Q, Dv]
    out = jnp.dot(gated.reshape(Bb * Q, Dv).astype(mxu_dt), wo_ref[...],
                  preferred_element_type=f32) + bo_ref[...]     # [Bb*Q, O]
    o_ref[...] = out.reshape(Bb, Q, O).astype(o_ref.dtype)


def _vmem_soft_cap_bytes():
    """~75% of the per-core VMEM (v5e/v6e: 128 MiB, v7x: 64 MiB)."""
    try:
        cap = int(pltpu.get_tpu_info().vmem_capacity_bytes)
    except Exception:
        cap = 64 << 20                      # assume the tightest generation (v7x)
    return (cap * 3) // 4


def global_attention(q_data, m_data, q_mask, bias_unused, params, *,
                     num_head, key_dim, value_dim, batch_block=None):
    """Pallas implementation of GlobalAttentionOpt.forward.

    Like the PyTorch module, the `bias` argument is ignored — the module
    recomputes the additive bias from q_mask internally.
    """
    del bias_unused
    wq, wk, wv, wg, bg, wo, bo = params
    B, Q, Dk = q_data.shape
    _, K, Dv = m_data.shape
    O = wo.shape[1]
    assert Dk == num_head * key_dim and Dv == num_head * value_dim
    # The key mask is derived from q_mask[..., 0] (length Q) and applied over
    # the K key axis — only valid for global attention where Q == K.
    assert Q == K, "GlobalAttention assumes num_queries == num_keys"

    # ---- wrapper-side glue ----
    mask_row = q_mask[:, None, :, 0]                       # [B, 1, K] key-mask row
    # halve mask HBM read traffic (binary 0/1 masks are exact in bf16)
    qm_pass = q_mask.astype(jnp.bfloat16) if q_mask.dtype == jnp.float32 else q_mask
    mrow_pass = mask_row.astype(jnp.bfloat16) if mask_row.dtype == jnp.float32 else mask_row
    wq_s = wq * (1.0 / math.sqrt(key_dim))                 # fold attention scale into wq
    wkv = jnp.concatenate([wk, wv], axis=1)                # [Dv, kd+vd] fused K/V weights
    bg2 = bg.reshape(1, Dv).astype(jnp.float32)
    bo2 = bo.reshape(1, O).astype(jnp.float32)
    if q_data.dtype == jnp.bfloat16:                       # bf16 MXU path
        wq_s, wkv, wg_p, wo_p = (w.astype(jnp.bfloat16) for w in (wq_s, wkv, wg, wo))
    else:
        wg_p, wo_p = wg, wo

    # ---- per-generation VMEM budget and batch_block selection ----
    isz = jnp.dtype(q_data.dtype).itemsize
    m_isz = jnp.dtype(qm_pass.dtype).itemsize
    per_b_bytes = (Q * Dk + K * Dv + Q * O) * isz + (Q * Dk + K) * m_isz
    w_isz = jnp.dtype(wq_s.dtype).itemsize
    wgt_bytes = (wq_s.size + wkv.size + wg_p.size + wo_p.size + Dv + O) * w_isz
    soft_cap = _vmem_soft_cap_bytes()
    headroom = 8 << 20
    # factor ~4: double-buffered activation blocks + in-kernel f32 intermediates
    max_bb_vmem = max(1, int((soft_cap - headroom - 2 * wgt_bytes)
                             // max(1, 4 * per_b_bytes)))

    if batch_block is None:
        batch_block = max(1, -(-512 // Q))                 # target >= 512 rows / step
    batch_block = min(batch_block, max_bb_vmem, B)
    if B >= 2:
        batch_block = min(max(batch_block, 1), B // 2)     # keep grid >= 2 (v7x 2 TCs)
    batch_block = max(1, batch_block)
    bb = max(d for d in range(1, batch_block + 1) if B % d == 0)

    vmem_bytes = int(min(soft_cap,
                         max(32 << 20, 4 * bb * per_b_bytes + 2 * wgt_bytes + headroom)))

    kernel = functools.partial(
        _global_attention_kernel,
        num_head=num_head, key_dim=key_dim, value_dim=value_dim,
    )

    return pl.pallas_call(
        kernel,
        out_shape=jax.ShapeDtypeStruct((B, Q, O), q_data.dtype),
        grid_spec=pltpu.PrefetchScalarGridSpec(
            num_scalar_prefetch=0,
            grid=(B // bb,),
            in_specs=[
                pl.BlockSpec((bb, Q, Dk), lambda b: (b, 0, 0)),               # q_data
                pl.BlockSpec((bb, K, Dv), lambda b: (b, 0, 0)),               # m_data
                pl.BlockSpec((bb, Q, Dk), lambda b: (b, 0, 0)),               # q_mask (bf16)
                pl.BlockSpec((bb, 1, K), lambda b: (b, 0, 0)),                # mask_row (bf16)
                pl.BlockSpec((Dk, Dk), lambda b: (0, 0)),                     # wq (pre-scaled)
                pl.BlockSpec((Dv, key_dim + value_dim), lambda b: (0, 0)),    # wkv
                pl.BlockSpec((Dk, Dv), lambda b: (0, 0)),                     # wg
                pl.BlockSpec((1, Dv), lambda b: (0, 0)),                      # bg
                pl.BlockSpec((Dv, O), lambda b: (0, 0)),                      # wo
                pl.BlockSpec((1, O), lambda b: (0, 0)),                       # bo
            ],
            out_specs=pl.BlockSpec((bb, Q, O), lambda b: (b, 0, 0)),
        ),
        compiler_params=pltpu.CompilerParams(
            dimension_semantics=("parallel",),     # shard batch steps over both v7x TCs
            vmem_limit_bytes=vmem_bytes,
        ),
    )(q_data, m_data, qm_pass, mrow_pass, wq_s, wkv, wg_p, bg2, wo_p, bo2)


def reference(q_data, m_data, q_mask, params, *, num_head, key_dim, value_dim):
    """Plain-JAX mirror of the PyTorch forward, for validation."""
    wq, wk, wv, wg, bg, wo, bo = params
    B, Q, Dk = q_data.shape
    v = m_data @ wv                                            # [B, K, vd]
    k = m_data @ wk                                            # [B, K, kd]
    q_avg = jnp.sum(q_mask * q_data, axis=1) / (jnp.sum(q_mask, axis=1) + 1e-10)
    q = (q_avg @ wq) * (1.0 / math.sqrt(key_dim))              # [B, H*kd]
    q = q.reshape(B, num_head, key_dim)                        # [B, H, kd]
    bias = 1e9 * (q_mask[:, None, :, 0] - 1.0)                 # [B, 1, K]
    logits = jnp.einsum('bhd,bkd->bhk', q, k) + bias           # [B, H, K]
    weights = jax.nn.softmax(logits, axis=-1)
    weighted_avg = jnp.einsum('bhk,bkd->bhd', weights, v)      # [B, H, vd]
    gate = jax.nn.sigmoid(q_data @ wg + bg)                    # [B, Q, H*vd]
    gate = gate.reshape(B, Q, num_head, value_dim)
    out = weighted_avg[:, None] * gate                         # [B, Q, H, vd]
    out = out.reshape(B, Q, num_head * value_dim)
    return out @ wo + bo


if __name__ == "__main__":
    # Small config consistent with the module:
    #   num_head=4, all_key_dim=all_value_dim=32 -> per-head key/value dim = 8
    B, Q, K = 4, 16, 16          # global attention: num_keys == num_queries
    num_head = 4
    all_key_dim = 32
    all_value_dim = 32
    output_dim = 32
    key_dim = all_key_dim // num_head
    value_dim = all_value_dim // num_head

    root = jax.random.PRNGKey(0)
    keys = jax.random.split(root, 12)

    # deterministic synthetic parameters ([in, out] layout)
    wq = jax.random.normal(keys[0], (all_key_dim, all_key_dim), jnp.float32) / math.sqrt(all_key_dim)
    wk = jax.random.normal(keys[1], (all_value_dim, key_dim), jnp.float32) / math.sqrt(all_value_dim)
    wv = jax.random.normal(keys[2], (all_value_dim, value_dim), jnp.float32) / math.sqrt(all_value_dim)
    wg = jax.random.normal(keys[3], (all_key_dim, all_value_dim), jnp.float32) / math.sqrt(all_key_dim)
    bg = jnp.ones((all_value_dim,), jnp.float32)               # AF2 gating bias init = 1
    wo = jax.random.normal(keys[4], (all_value_dim, output_dim), jnp.float32) * 0.02
    bo = jax.random.normal(keys[5], (output_dim,), jnp.float32) * 0.02
    params = (wq, wk, wv, wg, bg, wo, bo)

    # inputs
    q_data = jax.random.normal(keys[6], (B, Q, all_key_dim), jnp.float32)
    m_data = jax.random.normal(keys[7], (B, K, all_value_dim), jnp.float32)
    q_mask = jax.random.bernoulli(keys[8], 0.75, (B, Q, all_key_dim)).astype(jnp.float32)
    bias_in = jnp.zeros((B, Q, K), jnp.float32)  # ignored by the module's forward

    out = global_attention(
        q_data, m_data, q_mask, bias_in, params,
        num_head=num_head, key_dim=key_dim, value_dim=value_dim,
    )
    out = jax.block_until_ready(out)

    ref = reference(
        q_data, m_data, q_mask, params,
        num_head=num_head, key_dim=key_dim, value_dim=value_dim,
    )
    ref = jax.block_until_ready(ref)

    np.testing.assert_allclose(np.asarray(out), np.asarray(ref), rtol=2e-2, atol=2e-2)
    print("KERNEL_OK")
</pallas_src>

<mosaic_0001>
module attributes {stable_mosaic.version = 11 : i64} {
  func.func @_global_attention_kernel(%arg0: i32, %arg1: memref<2x16x32xf32, #tpu.memory_space<vmem>>, %arg2: memref<2x16x32xf32, #tpu.memory_space<vmem>>, %arg3: memref<2x16x32xbf16, #tpu.memory_space<vmem>>, %arg4: memref<2x1x16xbf16, #tpu.memory_space<vmem>>, %arg5: memref<32x32xf32, #tpu.memory_space<vmem>>, %arg6: memref<32x16xf32, #tpu.memory_space<vmem>>, %arg7: memref<32x32xf32, #tpu.memory_space<vmem>>, %arg8: memref<1x32xf32, #tpu.memory_space<vmem>>, %arg9: memref<32x32xf32, #tpu.memory_space<vmem>>, %arg10: memref<1x32xf32, #tpu.memory_space<vmem>>, %arg11: memref<2x16x32xf32, #tpu.memory_space<vmem>>) attributes {dimension_semantics = [#tpu.dimension_semantics<parallel>], iteration_bounds = array<i64: 2>, scalar_prefetch = 0 : i64, scratch_operands = 0 : i64, tpu.core_type = #tpu.core_type<tc>, window_params = [{transform_indices = @transform_0, window_bounds = array<i64: 2, 16, 32>}, {transform_indices = @transform_1, window_bounds = array<i64: 2, 16, 32>}, {transform_indices = @transform_2, window_bounds = array<i64: 2, 16, 32>}, {transform_indices = @transform_3, window_bounds = array<i64: 2, 1, 16>}, {pipeline_mode = #tpu.pipeline_mode<synchronous>, transform_indices = @transform_4, window_bounds = array<i64: 32, 32>}, {pipeline_mode = #tpu.pipeline_mode<synchronous>, transform_indices = @transform_5, window_bounds = array<i64: 32, 16>}, {pipeline_mode = #tpu.pipeline_mode<synchronous>, transform_indices = @transform_6, window_bounds = array<i64: 32, 32>}, {pipeline_mode = #tpu.pipeline_mode<synchronous>, transform_indices = @transform_7, window_bounds = array<i64: 1, 32>}, {pipeline_mode = #tpu.pipeline_mode<synchronous>, transform_indices = @transform_8, window_bounds = array<i64: 32, 32>}, {pipeline_mode = #tpu.pipeline_mode<synchronous>, transform_indices = @transform_9, window_bounds = array<i64: 1, 32>}, {transform_indices = @transform_10, window_bounds = array<i64: 2, 16, 32>}]} {
    %c0 = arith.constant 0 : index
    %c0_0 = arith.constant 0 : index
    %c0_1 = arith.constant 0 : index
    %0 = vector.load %arg1[%c0, %c0_0, %c0_1] : memref<2x16x32xf32, #tpu.memory_space<vmem>>, vector<2x16x32xf32>
    %c0_2 = arith.constant 0 : index
    %c0_3 = arith.constant 0 : index
    %c0_4 = arith.constant 0 : index
    %1 = vector.load %arg3[%c0_2, %c0_3, %c0_4] : memref<2x16x32xbf16, #tpu.memory_space<vmem>>, vector<2x16x32xbf16>
    %2 = arith.extf %1 : vector<2x16x32xbf16> to vector<2x16x32xf32>
    %3 = vector.shape_cast %0 : vector<2x16x32xf32> to vector<32x32xf32>
    %c0_5 = arith.constant 0 : index
    %c0_6 = arith.constant 0 : index
    %c0_7 = arith.constant 0 : index
    %4 = vector.load %arg2[%c0_5, %c0_6, %c0_7] : memref<2x16x32xf32, #tpu.memory_space<vmem>>, vector<2x16x32xf32>
    %5 = vector.shape_cast %4 : vector<2x16x32xf32> to vector<32x32xf32>
    %c0_8 = arith.constant 0 : index
    %c0_9 = arith.constant 0 : index
    %6 = vector.load %arg7[%c0_8, %c0_9] : memref<32x32xf32, #tpu.memory_space<vmem>>, vector<32x32xf32>
    %cst = arith.constant dense<0.000000e+00> : vector<32x32xf32>
    %7 = tpu.matmul %3, %6, %cst {dimension_numbers = #tpu.dot_dimension_numbers<[1], [0], [0], [1], [0, 0, 1, 1], [], []>} : vector<32x32xf32>, vector<32x32xf32>, vector<32x32xf32> -> vector<32x32xf32>
    %c0_10 = arith.constant 0 : index
    %c0_11 = arith.constant 0 : index
    %8 = vector.load %arg8[%c0_10, %c0_11] : memref<1x32xf32, #tpu.memory_space<vmem>>, vector<1x32xf32>
    %9 = vector.broadcast %8 : vector<1x32xf32> to vector<32x32xf32>
    %10 = arith.addf %7, %9 : vector<32x32xf32>
    %11 = arith.negf %10 : vector<32x32xf32>
    %12 = math.exp %11 : vector<32x32xf32>
    %cst_12 = arith.constant 1.000000e+00 : f32
    %13 = vector.broadcast %cst_12 : f32 to vector<32x32xf32>
    %14 = arith.addf %13, %12 : vector<32x32xf32>
    %15 = arith.divf %13, %14 : vector<32x32xf32>
    %c0_13 = arith.constant 0 : index
    %c0_14 = arith.constant 0 : index
    %16 = vector.load %arg6[%c0_13, %c0_14] : memref<32x16xf32, #tpu.memory_space<vmem>>, vector<32x16xf32>
    %cst_15 = arith.constant dense<0.000000e+00> : vector<32x16xf32>
    %17 = tpu.matmul %5, %16, %cst_15 {dimension_numbers = #tpu.dot_dimension_numbers<[1], [0], [0], [1], [0, 0, 1, 1], [], []>} : vector<32x32xf32>, vector<32x16xf32>, vector<32x16xf32> -> vector<32x16xf32>
    %18 = vector.shape_cast %17 : vector<32x16xf32> to vector<2x16x16xf32>
    %19 = vector.extract_strided_slice %18 {offsets = [0, 0, 0], sizes = [2, 16, 8], strides = [1, 1, 1]} : vector<2x16x16xf32> to vector<2x16x8xf32>
    %20 = vector.extract_strided_slice %18 {offsets = [0, 0, 8], sizes = [2, 16, 8], strides = [1, 1, 1]} : vector<2x16x16xf32> to vector<2x16x8xf32>
    %21 = arith.mulf %2, %0 : vector<2x16x32xf32>
    %cst_16 = arith.constant dense<0.000000e+00> : vector<2x32xf32>
    %22 = vector.multi_reduction <add>, %21, %cst_16 [1] : vector<2x16x32xf32> to vector<2x32xf32>
    %cst_17 = arith.constant dense<0.000000e+00> : vector<2x32xf32>
    %23 = vector.multi_reduction <add>, %2, %cst_17 [1] : vector<2x16x32xf32> to vector<2x32xf32>
    %cst_18 = arith.constant 1.000000e-10 : f32
    %24 = vector.broadcast %cst_18 : f32 to vector<2x32xf32>
    %25 = arith.addf %23, %24 : vector<2x32xf32>
    %26 = tpu.reciprocal %25 : vector<2x32xf32> -> vector<2x32xf32>
    %27 = arith.mulf %22, %26 : vector<2x32xf32>
    %c0_19 = arith.constant 0 : index
    %c0_20 = arith.constant 0 : index
    %28 = vector.load %arg5[%c0_19, %c0_20] : memref<32x32xf32, #tpu.memory_space<vmem>>, vector<32x32xf32>
    %cst_21 = arith.constant dense<0.000000e+00> : vector<2x32xf32>
    %29 = tpu.matmul %27, %28, %cst_21 {dimension_numbers = #tpu.dot_dimension_numbers<[1], [0], [0], [1], [0, 0, 1, 1], [], []>} : vector<2x32xf32>, vector<32x32xf32>, vector<2x32xf32> -> vector<2x32xf32>
    %30 = vector.shape_cast %29 : vector<2x32xf32> to vector<2x4x8xf32>
    %c0_22 = arith.constant 0 : index
    %c0_23 = arith.constant 0 : index
    %c0_24 = arith.constant 0 : index
    %31 = vector.load %arg4[%c0_22, %c0_23, %c0_24] : memref<2x1x16xbf16, #tpu.memory_space<vmem>>, vector<2x1x16xbf16>
    %32 = arith.extf %31 : vector<2x1x16xbf16> to vector<2x1x16xf32>
    %cst_25 = arith.constant 1.000000e+00 : f32
    %33 = vector.broadcast %cst_25 : f32 to vector<2x1x16xf32>
    %34 = arith.subf %32, %33 : vector<2x1x16xf32>
    %cst_26 = arith.constant 1.000000e+09 : f32
    %35 = vector.broadcast %cst_26 : f32 to vector<2x1x16xf32>
    %36 = arith.mulf %35, %34 : vector<2x1x16xf32>
    "tpu.trace_start"() <{level = 10 : i32, message = "bhd,bkd->bhk"}> : () -> ()
    %cst_27 = arith.constant dense<0.000000e+00> : vector<2x4x16xf32>
    %37 = tpu.matmul %30, %19, %cst_27 {dimension_numbers = #tpu.dot_dimension_numbers<[2], [2], [1], [1], [0, 0, 0, 1, 1, 1], [0], [0]>} : vector<2x4x8xf32>, vector<2x16x8xf32>, vector<2x4x16xf32> -> vector<2x4x16xf32>
    "tpu.trace_stop"() : () -> ()
    %38 = vector.broadcast %36 : vector<2x1x16xf32> to vector<2x4x16xf32>
    %39 = arith.addf %37, %38 : vector<2x4x16xf32>
    %cst_28 = arith.constant dense<0xFF800000> : vector<2x4xf32>
    %40 = vector.multi_reduction <maximumf>, %39, %cst_28 [2] : vector<2x4x16xf32> to vector<2x4xf32>
    %41 = vector.shape_cast %40 : vector<2x4xf32> to vector<2x4x1xf32>
    %42 = vector.broadcast %41 : vector<2x4x1xf32> to vector<2x4x16xf32>
    %43 = arith.subf %39, %42 : vector<2x4x16xf32>
    %44 = math.exp %43 : vector<2x4x16xf32>
    %cst_29 = arith.constant dense<0.000000e+00> : vector<2x4xf32>
    %45 = vector.multi_reduction <add>, %44, %cst_29 [2] : vector<2x4x16xf32> to vector<2x4xf32>
    %46 = vector.shape_cast %45 : vector<2x4xf32> to vector<2x4x1xf32>
    %47 = tpu.reciprocal %46 {approx = true} : vector<2x4x1xf32> -> vector<2x4x1xf32>
    %48 = vector.broadcast %47 : vector<2x4x1xf32> to vector<2x4x16xf32>
    %49 = arith.mulf %44, %48 : vector<2x4x16xf32>
    "tpu.trace_start"() <{level = 10 : i32, message = "bhk,bkd->bhd"}> : () -> ()
    %cst_30 = arith.constant dense<0.000000e+00> : vector<2x4x8xf32>
    %50 = tpu.matmul %49, %20, %cst_30 {dimension_numbers = #tpu.dot_dimension_numbers<[2], [1], [1], [2], [0, 0, 0, 1, 1, 2], [0], [0]>} : vector<2x4x16xf32>, vector<2x16x8xf32>, vector<2x4x8xf32> -> vector<2x4x8xf32>
    "tpu.trace_stop"() : () -> ()
    %51 = vector.shape_cast %15 : vector<32x32xf32> to vector<2x16x32xf32>
    %52 = vector.shape_cast %50 : vector<2x4x8xf32> to vector<2x1x32xf32>
    %53 = vector.broadcast %52 : vector<2x1x32xf32> to vector<2x16x32xf32>
    %54 = arith.mulf %51, %53 : vector<2x16x32xf32>
    %55 = vector.shape_cast %54 : vector<2x16x32xf32> to vector<32x32xf32>
    %c0_31 = arith.constant 0 : index
    %c0_32 = arith.constant 0 : index
    %56 = vector.load %arg9[%c0_31, %c0_32] : memref<32x32xf32, #tpu.memory_space<vmem>>, vector<32x32xf32>
    %cst_33 = arith.constant dense<0.000000e+00> : vector<32x32xf32>
    %57 = tpu.matmul %55, %56, %cst_33 {dimension_numbers = #tpu.dot_dimension_numbers<[1], [0], [0], [1], [0, 0, 1, 1], [], []>} : vector<32x32xf32>, vector<32x32xf32>, vector<32x32xf32> -> vector<32x32xf32>
    %c0_34 = arith.constant 0 : index
    %c0_35 = arith.constant 0 : index
    %58 = vector.load %arg10[%c0_34, %c0_35] : memref<1x32xf32, #tpu.memory_space<vmem>>, vector<1x32xf32>
    %59 = vector.broadcast %58 : vector<1x32xf32> to vector<32x32xf32>
    %60 = arith.addf %57, %59 : vector<32x32xf32>
    %61 = vector.shape_cast %60 : vector<32x32xf32> to vector<2x16x32xf32>
    %c0_36 = arith.constant 0 : index
    %c0_37 = arith.constant 0 : index
    %c0_38 = arith.constant 0 : index
    %62 = vector.load %arg11[%c0_36, %c0_37, %c0_38] : memref<2x16x32xf32, #tpu.memory_space<vmem>>, vector<2x16x32xf32>
    tpu.vector_store %arg11[%c0_36, %c0_37, %c0_38], %61 {strides = array<i32>} : memref<2x16x32xf32, #tpu.memory_space<vmem>>, vector<2x16x32xf32>,
    return
  }
  func.func @transform_0(%arg0: i32) -> (i32, i32, i32) {
    %c0_i32 = arith.constant 0 : i32
    %c0_i32_0 = arith.constant 0 : i32
    %c0_i32_1 = arith.constant 0 : i32
    return %arg0, %c0_i32, %c0_i32_0 : i32, i32, i32
  }
  func.func @transform_1(%arg0: i32) -> (i32, i32, i32) {
    %c0_i32 = arith.constant 0 : i32
    %c0_i32_0 = arith.constant 0 : i32
    %c0_i32_1 = arith.constant 0 : i32
    return %arg0, %c0_i32, %c0_i32_0 : i32, i32, i32
  }
  func.func @transform_2(%arg0: i32) -> (i32, i32, i32) {
    %c0_i32 = arith.constant 0 : i32
    %c0_i32_0 = arith.constant 0 : i32
    %c0_i32_1 = arith.constant 0 : i32
    return %arg0, %c0_i32, %c0_i32_0 : i32, i32, i32
  }
  func.func @transform_3(%arg0: i32) -> (i32, i32, i32) {
    %c0_i32 = arith.constant 0 : i32
    %c0_i32_0 = arith.constant 0 : i32
    %c0_i32_1 = arith.constant 0 : i32
    return %arg0, %c0_i32, %c0_i32_0 : i32, i32, i32
  }
  func.func @transform_4(%arg0: i32) -> (i32, i32) {
    %c0_i32 = arith.constant 0 : i32
    %c0_i32_0 = arith.constant 0 : i32
    %c0_i32_1 = arith.constant 0 : i32
    return %c0_i32, %c0_i32_0 : i32, i32
  }
  func.func @transform_5(%arg0: i32) -> (i32, i32) {
    %c0_i32 = arith.constant 0 : i32
    %c0_i32_0 = arith.constant 0 : i32
    %c0_i32_1 = arith.constant 0 : i32
    return %c0_i32, %c0_i32_0 : i32, i32
  }
  func.func @transform_6(%arg0: i32) -> (i32, i32) {
    %c0_i32 = arith.constant 0 : i32
    %c0_i32_0 = arith.constant 0 : i32
    %c0_i32_1 = arith.constant 0 : i32
    return %c0_i32, %c0_i32_0 : i32, i32
  }
  func.func @transform_7(%arg0: i32) -> (i32, i32) {
    %c0_i32 = arith.constant 0 : i32
    %c0_i32_0 = arith.constant 0 : i32
    %c0_i32_1 = arith.constant 0 : i32
    return %c0_i32, %c0_i32_0 : i32, i32
  }
  func.func @transform_8(%arg0: i32) -> (i32, i32) {
    %c0_i32 = arith.constant 0 : i32
    %c0_i32_0 = arith.constant 0 : i32
    %c0_i32_1 = arith.constant 0 : i32
    return %c0_i32, %c0_i32_0 : i32, i32
  }
  func.func @transform_9(%arg0: i32) -> (i32, i32) {
    %c0_i32 = arith.constant 0 : i32
    %c0_i32_0 = arith.constant 0 : i32
    %c0_i32_1 = arith.constant 0 : i32
    return %c0_i32, %c0_i32_0 : i32, i32
  }
  func.func @transform_10(%arg0: i32) -> (i32, i32, i32) {
    %c0_i32 = arith.constant 0 : i32
    %c0_i32_0 = arith.constant 0 : i32
    %c0_i32_1 = arith.constant 0 : i32
    return %arg0, %c0_i32, %c0_i32_0 : i32, i32, i32
  }
}

</mosaic_0001>

<llo_original>
// kernel: tpu_custom_call.1
$region0: #{tpu_custom_call.1}
  #allocation0 [shape = 'u32[]', space=smem, size = 0x4, offset = 0x4, fixed_abs, tag = 'smem constant byte address 0x4 - core index']
  #allocation1 [shape = 'u32[144,128]{1,0:T(1,128)}', space=vmem, size = 0x12000, scoped, tag = 'internal scratch']
  %s0 = inlined_call_operand.hbm [shape: f32[4,16,32], index: 0, kind: input, shape index: {}]
  %s1 = inlined_call_operand.hbm [shape: f32[4,16,32], index: 1, kind: input, shape index: {}]
  %s2 = inlined_call_operand.vmem [shape: bf16[4,16,32], index: 2, kind: input, shape index: {}]
  %s3 = inlined_call_operand.vmem [shape: bf16[4,1,16], index: 3, kind: input, shape index: {}]
  %s4 = inlined_call_operand.hbm [shape: f32[32,32], index: 4, kind: input, shape index: {}]
  %s5 = inlined_call_operand.vmem [shape: f32[32,16], index: 5, kind: input, shape index: {}]
  %s6 = inlined_call_operand.vmem [shape: f32[32,32], index: 6, kind: input, shape index: {}]
  %s7 = inlined_call_operand.vmem [shape: f32[1,32], index: 7, kind: input, shape index: {}]
  %s8 = inlined_call_operand.hbm [shape: f32[32,32], index: 8, kind: input, shape index: {}]
  %s9 = inlined_call_operand.vmem [shape: f32[1,32], index: 9, kind: input, shape index: {}]
  %s10 = inlined_call_operand.hbm [shape: f32[4,16,32], index: 10, kind: output, shape index: {}]
  %s11 = sld [smem:[#allocation0]]
  $region89: #{tpu_custom_call.1} parent=0
    _
  %s13 = ssub.s32 1, %s11
  %s14 = scalar_select 0, %s13, %s11
  $region1: #{tpu_custom_call.1} parent=0
    #allocation2 [shape = 'u8[32768]{0}', space=vmem, size = 0x8000, scoped, tag = 'input window, operand 0']
    #allocation3 [shape = 's32[2]{0}', space=sflag, size = 0x8, scoped, tag = 'scoped memory for tpu_custom_call.1']
    #allocation4 [shape = 's32[2]{0}', space=sflag, size = 0x8, scoped, tag = 'scoped memory for tpu_custom_call.1']
    #allocation5 [shape = 'u8[32768]{0}', space=vmem, size = 0x8000, scoped, tag = 'input window, operand 1']
    #allocation6 [shape = 's32[2]{0}', space=sflag, size = 0x8, scoped, tag = 'scoped memory for tpu_custom_call.1']
    #allocation7 [shape = 'u8[16384]{0}', space=vmem, size = 0x4000, scoped, tag = 'input window, operand 4, single buffered']
    #allocation8 [shape = 'u8[16384]{0}', space=vmem, size = 0x4000, scoped, tag = 'input window, operand 8, single buffered']
    #allocation9 [shape = 's32[1]{0}', space=sflag, size = 0x4, scoped, tag = 'scoped memory for tpu_custom_call.1']
    #allocation10 [shape = 'u8[32768]{0}', space=vmem, size = 0x8000, scoped, tag = 'output window, operand 0']
    %15 = vsyncpa [#allocation3], 0
    %s16 = scalar_lea.sflag [#allocation3], 1
    %17 = vsyncpa %s16, 0
    %18 = vsyncpa [#allocation6], 0
    %s19 = scalar_lea.sflag [#allocation6], 1
    %20 = vsyncpa %s19, 0
    %21 = vsyncpa [#allocation9], 0
    %22 = vsyncpa [#allocation4], 0
    %s23 = scalar_lea.sflag [#allocation4], 1
    %24 = vsyncpa %s23, 0
    loop: start=0, step=1, limit=4
    $region2: #{tpu_custom_call.1} parent=1 // loop_pre_header
      _
    $region3: #{tpu_custom_call.1} parent=1 // loop_header
      %s26 = sphi 0, %s30
      %p27 = scmp.ge.s32.totalorder %s26, 4
      %s36 = sphi 0, %s38
      %s39 = sphi 0, %s36
      %s40 = sphi 0, %s39
      %s56 = sphi 0, %s40
      %s62 = sphi 0, %s64
      %s65 = sphi 0, %s62
      %s66 = sphi 0, %s65
      %s82 = sphi 0, %s66
      %s88 = sphi 0, %s90
      %s91 = sphi 0, %s88
      %s92 = sphi 0, %s91
      %s108 = sphi 0, %s92
      %s114 = sphi 0, %s116
      %s117 = sphi 0, %s114
      %s118 = sphi 0, %s117
      %s134 = sphi 0, %s118
      %s138 = sphi 0, %s138
      %s140 = sphi 0, %s138
      %s141 = sphi 0, %s140
      %s155 = sphi 0, %s141
      %s159 = sphi 0, %s159
      %s161 = sphi 0, %s159
      %s162 = sphi 0, %s161
      %s176 = sphi 0, %s162
      %s180 = sphi 0, %s180
      %s182 = sphi 0, %s180
      %s183 = sphi 0, %s182
      %s197 = sphi 0, %s183
      %s201 = sphi 0, %s201
      %s203 = sphi 0, %s201
      %s204 = sphi 0, %s203
      %s218 = sphi 0, %s204
      %s222 = sphi 0, %s222
      %s224 = sphi 0, %s222
      %s225 = sphi 0, %s224
      %s239 = sphi 0, %s225
      %s243 = sphi 0, %s243
      %s245 = sphi 0, %s243
      %s246 = sphi 0, %s245
      %s260 = sphi 0, %s246
      %s266 = sphi 0, %s268
      %s269 = sphi 0, %s266
      %s270 = sphi 0, %s269
      %s286 = sphi 0, %s270
    $region4: #{tpu_custom_call.1} parent=1 // loop_header_branch
      %29 = sbr.rel (%p27) target = $region8
    $region5: #{tpu_custom_call.1} parent=1 // loop_body
      %s31 = ssub.s32 %s26, 1
      %s32 = ssub.s32 %s26, 2
      %s33 = sadd.s32 %s26, 1
      %s34 = ssub.s32 %s26, %s33
      %p35 = scmp.eq.s32.totalorder %s34, 0
      %s37 = sadd.s32 %s36, 1
      %s38 = scalar_select %p35, %s36, %s37
      %p41 = pneg %p35
      %p42 = scmp.eq.s32.totalorder %s26, 1
      %p43 = por %p41, %p42
      %p44 = scmp.ne.s32.totalorder %s36, %s39
      %p45 = scmp.eq.s32.totalorder %s26, 0
      %p46 = por %p44, %p45
      %p47 = scmp.ne.s32.totalorder %s36, %s39
      %p48 = scmp.eq.s32.totalorder %s31, 1
      %p49 = por %p47, %p48
      %p50 = scmp.ne.s32.totalorder %s39, %s40
      %p51 = scmp.eq.s32.totalorder %s31, 0
      %p52 = por %p50, %p51
      %p53 = scmp.ne.s32.totalorder %s39, %s40
      %p54 = scmp.eq.s32.totalorder %s32, 1
      %p55 = por %p53, %p54
      %p57 = scmp.ne.s32.totalorder %s40, %s56
      %p58 = scmp.eq.s32.totalorder %s32, 0
      %p59 = por %p57, %p58
      %s60 = ssub.s32 %s26, %s33
      %p61 = scmp.eq.s32.totalorder %s60, 0
      %s63 = sadd.s32 %s62, 1
      %s64 = scalar_select %p61, %s62, %s63
      %p67 = pneg %p61
      %p68 = scmp.eq.s32.totalorder %s26, 1
      %p69 = por %p67, %p68
      %p70 = scmp.ne.s32.totalorder %s62, %s65
      %p71 = scmp.eq.s32.totalorder %s26, 0
      %p72 = por %p70, %p71
      %p73 = scmp.ne.s32.totalorder %s62, %s65
      %p74 = scmp.eq.s32.totalorder %s31, 1
      %p75 = por %p73, %p74
      %p76 = scmp.ne.s32.totalorder %s65, %s66
      %p77 = scmp.eq.s32.totalorder %s31, 0
      %p78 = por %p76, %p77
      %p79 = scmp.ne.s32.totalorder %s65, %s66
      %p80 = scmp.eq.s32.totalorder %s32, 1
      %p81 = por %p79, %p80
      %p83 = scmp.ne.s32.totalorder %s66, %s82
      %p84 = scmp.eq.s32.totalorder %s32, 0
      %p85 = por %p83, %p84
      %s86 = ssub.s32 %s26, %s33
      %p87 = scmp.eq.s32.totalorder %s86, 0
      %s89 = sadd.s32 %s88, 1
      %s90 = scalar_select %p87, %s88, %s89
      %p93 = pneg %p87
      %p94 = scmp.eq.s32.totalorder %s26, 1
      %p95 = por %p93, %p94
      %p96 = scmp.ne.s32.totalorder %s88, %s91
      %p97 = scmp.eq.s32.totalorder %s26, 0
      %p98 = por %p96, %p97
      %p99 = scmp.ne.s32.totalorder %s88, %s91
      %p100 = scmp.eq.s32.totalorder %s31, 1
      %p101 = por %p99, %p100
      %p102 = scmp.ne.s32.totalorder %s91, %s92
      %p103 = scmp.eq.s32.totalorder %s31, 0
      %p104 = por %p102, %p103
      %p105 = scmp.ne.s32.totalorder %s91, %s92
      %p106 = scmp.eq.s32.totalorder %s32, 1
      %p107 = por %p105, %p106
      %p109 = scmp.ne.s32.totalorder %s92, %s108
      %p110 = scmp.eq.s32.totalorder %s32, 0
      %p111 = por %p109, %p110
      %s112 = ssub.s32 %s26, %s33
      %p113 = scmp.eq.s32.totalorder %s112, 0
      %s115 = sadd.s32 %s114, 1
      %s116 = scalar_select %p113, %s114, %s115
      %p119 = pneg %p113
      %p120 = scmp.eq.s32.totalorder %s26, 1
      %p121 = por %p119, %p120
      %p122 = scmp.ne.s32.totalorder %s114, %s117
      %p123 = scmp.eq.s32.totalorder %s26, 0
      %p124 = por %p122, %p123
      %p125 = scmp.ne.s32.totalorder %s114, %s117
      %p126 = scmp.eq.s32.totalorder %s31, 1
      %p127 = por %p125, %p126
      %p128 = scmp.ne.s32.totalorder %s117, %s118
      %p129 = scmp.eq.s32.totalorder %s31, 0
      %p130 = por %p128, %p129
      %p131 = scmp.ne.s32.totalorder %s117, %s118
      %p132 = scmp.eq.s32.totalorder %s32, 1
      %p133 = por %p131, %p132
      %p135 = scmp.ne.s32.totalorder %s118, %s134
      %p136 = scmp.eq.s32.totalorder %s32, 0
      %p137 = por %p135, %p136
      %s139 = sadd.s32 %s138, 1
      %p142 = scmp.eq.s32.totalorder %s26, 1
      %p143 = scmp.ne.s32.totalorder %s138, %s140
      %p144 = scmp.eq.s32.totalorder %s26, 0
      %p145 = por %p143, %p144
      %p146 = scmp.ne.s32.totalorder %s138, %s140
      %p147 = scmp.eq.s32.totalorder %s31, 1
      %p148 = por %p146, %p147
      %p149 = scmp.ne.s32.totalorder %s140, %s141
      %p150 = scmp.eq.s32.totalorder %s31, 0
      %p151 = por %p149, %p150
      %p152 = scmp.ne.s32.totalorder %s140, %s141
      %p153 = scmp.eq.s32.totalorder %s32, 1
      %p154 = por %p152, %p153
      %p156 = scmp.ne.s32.totalorder %s141, %s155
      %p157 = scmp.eq.s32.totalorder %s32, 0
      %p158 = por %p156, %p157
      %s160 = sadd.s32 %s159, 1
      %p163 = scmp.eq.s32.totalorder %s26, 1
      %p164 = scmp.ne.s32.totalorder %s159, %s161
      %p165 = scmp.eq.s32.totalorder %s26, 0
      %p166 = por %p164, %p165
      %p167 = scmp.ne.s32.totalorder %s159, %s161
      %p168 = scmp.eq.s32.totalorder %s31, 1
      %p169 = por %p167, %p168
      %p170 = scmp.ne.s32.totalorder %s161, %s162
      %p171 = scmp.eq.s32.totalorder %s31, 0
      %p172 = por %p170, %p171
      %p173 = scmp.ne.s32.totalorder %s161, %s162
      %p174 = scmp.eq.s32.totalorder %s32, 1
      %p175 = por %p173, %p174
      %p177 = scmp.ne.s32.totalorder %s162, %s176
      %p178 = scmp.eq.s32.totalorder %s32, 0
      %p179 = por %p177, %p178
      %s181 = sadd.s32 %s180, 1
      %p184 = scmp.eq.s32.totalorder %s26, 1
      %p185 = scmp.ne.s32.totalorder %s180, %s182
      %p186 = scmp.eq.s32.totalorder %s26, 0
      %p187 = por %p185, %p186
      %p188 = scmp.ne.s32.totalorder %s180, %s182
      %p189 = scmp.eq.s32.totalorder %s31, 1
      %p190 = por %p188, %p189
      %p191 = scmp.ne.s32.totalorder %s182, %s183
      %p192 = scmp.eq.s32.totalorder %s31, 0
      %p193 = por %p191, %p192
      %p194 = scmp.ne.s32.totalorder %s182, %s183
      %p195 = scmp.eq.s32.totalorder %s32, 1
      %p196 = por %p194, %p195
      %p198 = scmp.ne.s32.totalorder %s183, %s197
      %p199 = scmp.eq.s32.totalorder %s32, 0
      %p200 = por %p198, %p199
      %s202 = sadd.s32 %s201, 1
      %p205 = scmp.eq.s32.totalorder %s26, 1
      %p206 = scmp.ne.s32.totalorder %s201, %s203
      %p207 = scmp.eq.s32.totalorder %s26, 0
      %p208 = por %p206, %p207
      %p209 = scmp.ne.s32.totalorder %s201, %s203
      %p210 = scmp.eq.s32.totalorder %s31, 1
      %p211 = por %p209, %p210
      %p212 = scmp.ne.s32.totalorder %s203, %s204
      %p213 = scmp.eq.s32.totalorder %s31, 0
      %p214 = por %p212, %p213
      %p215 = scmp.ne.s32.totalorder %s203, %s204
      %p216 = scmp.eq.s32.totalorder %s32, 1
      %p217 = por %p215, %p216
      %p219 = scmp.ne.s32.totalorder %s204, %s218
      %p220 = scmp.eq.s32.totalorder %s32, 0
      %p221 = por %p219, %p220
      %s223 = sadd.s32 %s222, 1
      %p226 = scmp.eq.s32.totalorder %s26, 1
      %p227 = scmp.ne.s32.totalorder %s222, %s224
      %p228 = scmp.eq.s32.totalorder %s26, 0
      %p229 = por %p227, %p228
      %p230 = scmp.ne.s32.totalorder %s222, %s224
      %p231 = scmp.eq.s32.totalorder %s31, 1
      %p232 = por %p230, %p231
      %p233 = scmp.ne.s32.totalorder %s224, %s225
      %p234 = scmp.eq.s32.totalorder %s31, 0
      %p235 = por %p233, %p234
      %p236 = scmp.ne.s32.totalorder %s224, %s225
      %p237 = scmp.eq.s32.totalorder %s32, 1
      %p238 = por %p236, %p237
      %p240 = scmp.ne.s32.totalorder %s225, %s239
      %p241 = scmp.eq.s32.totalorder %s32, 0
      %p242 = por %p240, %p241
      %s244 = sadd.s32 %s243, 1
      %p247 = scmp.eq.s32.totalorder %s26, 1
      %p248 = scmp.ne.s32.totalorder %s243, %s245
      %p249 = scmp.eq.s32.totalorder %s26, 0
      %p250 = por %p248, %p249
      %p251 = scmp.ne.s32.totalorder %s243, %s245
      %p252 = scmp.eq.s32.totalorder %s31, 1
      %p253 = por %p251, %p252
      %p254 = scmp.ne.s32.totalorder %s245, %s246
      %p255 = scmp.eq.s32.totalorder %s31, 0
      %p256 = por %p254, %p255
      %p257 = scmp.ne.s32.totalorder %s245, %s246
      %p258 = scmp.eq.s32.totalorder %s32, 1
      %p259 = por %p257, %p258
      %p261 = scmp.ne.s32.totalorder %s246, %s260
      %p262 = scmp.eq.s32.totalorder %s32, 0
      %p263 = por %p261, %p262
      %s264 = ssub.s32 %s26, %s33
      %p265 = scmp.eq.s32.totalorder %s264, 0
      %s267 = sadd.s32 %s266, 1
      %s268 = scalar_select %p265, %s266, %s267
      %p271 = pneg %p265
      %p272 = scmp.eq.s32.totalorder %s26, 1
      %p273 = por %p271, %p272
      %p274 = scmp.ne.s32.totalorder %s266, %s269
      %p275 = scmp.eq.s32.totalorder %s26, 0
      %p276 = por %p274, %p275
      %p277 = scmp.ne.s32.totalorder %s266, %s269
      %p278 = scmp.eq.s32.totalorder %s31, 1
      %p279 = por %p277, %p278
      %p280 = scmp.ne.s32.totalorder %s269, %s270
      %p281 = scmp.eq.s32.totalorder %s31, 0
      %p282 = por %p280, %p281
      %p283 = scmp.ne.s32.totalorder %s269, %s270
      %p284 = scmp.eq.s32.totalorder %s32, 1
      %p285 = por %p283, %p284
      %p287 = scmp.ne.s32.totalorder %s270, %s286
      %p288 = scmp.eq.s32.totalorder %s32, 0
      %p289 = por %p287, %p288
      %p290 = scmp.le.s32.totalorder 1, %s26
      %p291 = scmp.lt.s32.totalorder %s26, 3
      %p292 = pnand %p290, %p291
      %p293 = pneg %p292
      // Predicated region
      $region9: #{tpu_custom_call.1} parent=5 // pred_check
        _
      $region10: #{tpu_custom_call.1} parent=5 // pred_check_branch
        %295 = sbr.rel (%p292) target = $region12
      $region11: #{tpu_custom_call.1} parent=5 // pred_region
        %s296 = ssub.s32 %s26, 1
        // Predicated region
        $region13: #{tpu_custom_call.1} parent=11 // pred_check
          %p297 = pneg %p151
        $region14: #{tpu_custom_call.1} parent=11 // pred_check_branch
          %299 = sbr.rel (%p297) target = $region16
        $region15: #{tpu_custom_call.1} parent=11 // pred_region
          %s301 = ssub.s32 512, 512
          %302 = vsyncadd [#allocation6], %s301
          %s303 = sshll.u32 [#allocation7], 4
          %s304 = int_to_ptr.vmem [resolvable:$true] %s303
          %309 = dma.hbm_to_vmem [thread:$0]  %s4, 512, %s304, [#allocation6], 128, 128, 8
        $region16: #{tpu_custom_call.1} parent=11 // pred_fallthru
          _
        // Predicated region
        $region17: #{tpu_custom_call.1} parent=11 // pred_check
          %p310 = pneg %p172
        $region18: #{tpu_custom_call.1} parent=11 // pred_check_branch
          %312 = sbr.rel (%p310) target = $region20
        $region19: #{tpu_custom_call.1} parent=11 // pred_region
          _
        $region20: #{tpu_custom_call.1} parent=11 // pred_fallthru
          _
        // Predicated region
        $region21: #{tpu_custom_call.1} parent=11 // pred_check
          %p313 = pneg %p193
        $region22: #{tpu_custom_call.1} parent=11 // pred_check_branch
          %315 = sbr.rel (%p313) target = $region24
        $region23: #{tpu_custom_call.1} parent=11 // pred_region
          _
        $region24: #{tpu_custom_call.1} parent=11 // pred_fallthru
          _
        // Predicated region
        $region25: #{tpu_custom_call.1} parent=11 // pred_check
          %p316 = pneg %p214
        $region26: #{tpu_custom_call.1} parent=11 // pred_check_branch
          %318 = sbr.rel (%p316) target = $region28
        $region27: #{tpu_custom_call.1} parent=11 // pred_region
          _
        $region28: #{tpu_custom_call.1} parent=11 // pred_fallthru
          _
        // Predicated region
        $region29: #{tpu_custom_call.1} parent=11 // pred_check
          %p319 = pneg %p235
        $region30: #{tpu_custom_call.1} parent=11 // pred_check_branch
          %321 = sbr.rel (%p319) target = $region32
        $region31: #{tpu_custom_call.1} parent=11 // pred_region
          %s323 = ssub.s32 512, 512
          %324 = vsyncadd [#allocation9], %s323
          %s325 = sshll.u32 [#allocation8], 4
          %s326 = int_to_ptr.vmem [resolvable:$true] %s325
          %331 = dma.hbm_to_vmem [thread:$0]  %s8, 512, %s326, [#allocation9], 128, 128, 8
        $region32: #{tpu_custom_call.1} parent=11 // pred_fallthru
          _
        // Predicated region
        $region33: #{tpu_custom_call.1} parent=11 // pred_check
          %p332 = pneg %p256
        $region34: #{tpu_custom_call.1} parent=11 // pred_check_branch
          %334 = sbr.rel (%p332) target = $region36
        $region35: #{tpu_custom_call.1} parent=11 // pred_region
          _
        $region36: #{tpu_custom_call.1} parent=11 // pred_fallthru
          _
      $region12: #{tpu_custom_call.1} parent=5 // pred_fallthru
        _
      %p335 = scmp.lt.s32.totalorder %s26, 2
      // Predicated region
      $region37: #{tpu_custom_call.1} parent=5 // pred_check
        %p336 = pneg %p335
      $region38: #{tpu_custom_call.1} parent=5 // pred_check_branch
        %338 = sbr.rel (%p336) target = $region40
      $region39: #{tpu_custom_call.1} parent=5 // pred_region
        // Predicated region
        $region41: #{tpu_custom_call.1} parent=39 // pred_check
          %p339 = pneg %p46
        $region42: #{tpu_custom_call.1} parent=39 // pred_check_branch
          %341 = sbr.rel (%p339) target = $region44
        $region43: #{tpu_custom_call.1} parent=39 // pred_region
          %s342 = sand.u32 %s36, 1
          %s343 = scalar_lea.sflag [#allocation3], %s342
          %s344 = sand.u32 %s36, 1
          %s345 = smul.addr %s344, 32
          %s346 = scalar_lea.vmem [#allocation2], %s345
          %s347 = smul.u32 2, %s26
          %s349 = ssub.s32 512, 512
          %350 = vsyncadd %s343, %s349
          %s351 = smul.addr %s347, 2
          %s352 = smul.addr %s351, 128
          %s353 = scalar_lea.hbm %s0, %s352
          %s354 = sshll.u32 %s346, 4
          %s355 = int_to_ptr.vmem [resolvable:$true] %s354
          %360 = dma.hbm_to_vmem [thread:$0]  %s353, 512, %s355, %s343, 128, 128, 8
        $region44: #{tpu_custom_call.1} parent=39 // pred_fallthru
          _
        // Predicated region
        $region45: #{tpu_custom_call.1} parent=39 // pred_check
          %p361 = pneg %p72
        $region46: #{tpu_custom_call.1} parent=39 // pred_check_branch
          %363 = sbr.rel (%p361) target = $region48
        $region47: #{tpu_custom_call.1} parent=39 // pred_region
          %s364 = sand.u32 %s26, 1
          %s365 = scalar_lea.sflag [#allocation6], %s364
          %s366 = sand.u32 %s62, 1
          %s367 = smul.addr %s366, 32
          %s368 = scalar_lea.vmem [#allocation5], %s367
          %s369 = smul.u32 2, %s26
          %s371 = ssub.s32 512, 512
          %372 = vsyncadd %s365, %s371
          %s373 = smul.addr %s369, 2
          %s374 = smul.addr %s373, 128
          %s375 = scalar_lea.hbm %s1, %s374
          %s376 = sshll.u32 %s368, 4
          %s377 = int_to_ptr.vmem [resolvable:$true] %s376
          %382 = dma.hbm_to_vmem [thread:$0]  %s375, 512, %s377, %s365, 128, 128, 8
        $region48: #{tpu_custom_call.1} parent=39 // pred_fallthru
          _
        // Predicated region
        $region49: #{tpu_custom_call.1} parent=39 // pred_check
          %p383 = pneg %p98
        $region50: #{tpu_custom_call.1} parent=39 // pred_check_branch
          %385 = sbr.rel (%p383) target = $region52
        $region51: #{tpu_custom_call.1} parent=39 // pred_region
          %s386 = smul.u32 2, %s26
          %p387 = scmp.lt.s32.totalorder %s386, 3
          %s388 = scalar_select %p387, %s386, 3
          %s389 = smul.addr %s388, 2
          %s390 = smul.addr %s389, 4
          %s391 = scalar_lea.vmem %s2, %s390
          %s392 = smul.u32 2, %s26
        $region52: #{tpu_custom_call.1} parent=39 // pred_fallthru
          _
        // Predicated region
        $region53: #{tpu_custom_call.1} parent=39 // pred_check
          %p393 = pneg %p124
        $region54: #{tpu_custom_call.1} parent=39 // pred_check_branch
          %395 = sbr.rel (%p393) target = $region56
        $region55: #{tpu_custom_call.1} parent=39 // pred_region
          %s396 = smul.u32 2, %s26
          %p397 = scmp.lt.s32.totalorder %s396, 3
          %s398 = scalar_select %p397, %s396, 3
          %s399 = scalar_lea.vmem %s3, %s398
          %s400 = smul.u32 2, %s26
        $region56: #{tpu_custom_call.1} parent=39 // pred_fallthru
          _
      $region40: #{tpu_custom_call.1} parent=5 // pred_fallthru
        _
      %p401 = scmp.le.s32.totalorder 1, %s26
      %p402 = scmp.lt.s32.totalorder %s26, 3
      %p403 = pnand %p401, %p402
      %p404 = pneg %p403
      // Predicated region
      $region57: #{tpu_custom_call.1} parent=5 // pred_check
        _
      $region58: #{tpu_custom_call.1} parent=5 // pred_check_branch
        %406 = sbr.rel (%p403) target = $region60
      $region59: #{tpu_custom_call.1} parent=5 // pred_region
        %s407 = ssub.s32 %s26, 1
        %s408 = sand.u32 %s39, 1
        %s409 = scalar_lea.sflag [#allocation3], %s408
        %s410 = sand.u32 %s39, 1
        %s411 = smul.addr %s410, 32
        %s412 = scalar_lea.vmem [#allocation2], %s411
        // Predicated region
        $region61: #{tpu_custom_call.1} parent=59 // pred_check
          %p413 = pneg %p52
        $region62: #{tpu_custom_call.1} parent=59 // pred_check_branch
          %415 = sbr.rel (%p413) target = $region64
        $region63: #{tpu_custom_call.1} parent=59 // pred_region
          %416 = dma.done %s409, 512
        $region64: #{tpu_custom_call.1} parent=59 // pred_fallthru
          _
        %s417 = sand.u32 %s31, 1
        %s418 = scalar_lea.sflag [#allocation6], %s417
        %s419 = sand.u32 %s65, 1
        %s420 = smul.addr %s419, 32
        %s421 = scalar_lea.vmem [#allocation5], %s420
        // Predicated region
        $region65: #{tpu_custom_call.1} parent=59 // pred_check
          %p422 = pneg %p78
        $region66: #{tpu_custom_call.1} parent=59 // pred_check_branch
          %424 = sbr.rel (%p422) target = $region68
        $region67: #{tpu_custom_call.1} parent=59 // pred_region
          %425 = dma.done %s418, 512
        $region68: #{tpu_custom_call.1} parent=59 // pred_fallthru
          _
        // Predicated region
        $region69: #{tpu_custom_call.1} parent=59 // pred_check
          %p426 = pneg %p151
        $region70: #{tpu_custom_call.1} parent=59 // pred_check_branch
          %428 = sbr.rel (%p426) target = $region72
        $region71: #{tpu_custom_call.1} parent=59 // pred_region
          %429 = dma.done [#allocation6], 512
        $region72: #{tpu_custom_call.1} parent=59 // pred_fallthru
          _
        // Predicated region
        $region73: #{tpu_custom_call.1} parent=59 // pred_check
          %p430 = pneg %p235
        $region74: #{tpu_custom_call.1} parent=59 // pred_check_branch
          %432 = sbr.rel (%p430) target = $region76
        $region75: #{tpu_custom_call.1} parent=59 // pred_region
          %433 = dma.done [#allocation9], 512
        $region76: #{tpu_custom_call.1} parent=59 // pred_fallthru
          _
        %s434 = sand.u32 %s39, 1
        %s435 = scalar_lea.sflag [#allocation3], %s434
        %s436 = sand.u32 %s39, 1
        %s437 = smul.addr %s436, 32
        %s438 = scalar_lea.vmem [#allocation2], %s437
        %p439 = pneg %p52
        %p440 = pneg %p49
        %s441 = sand.u32 %s31, 1
        %s442 = scalar_lea.sflag [#allocation6], %s441
        %s443 = sand.u32 %s65, 1
        %s444 = smul.addr %s443, 32
        %s445 = scalar_lea.vmem [#allocation5], %s444
        %p446 = pneg %p78
        %p447 = pneg %p75
        %s448 = smul.u32 2, %s31
        %p449 = scmp.lt.s32.totalorder %s448, 3
        %s450 = scalar_select %p449, %s448, 3
        %s451 = smul.addr %s450, 2
        %s452 = smul.addr %s451, 4
        %s453 = scalar_lea.vmem %s2, %s452
        %p454 = pneg %p104
        %p455 = pneg %p101
        %s456 = smul.u32 2, %s31
        %p457 = scmp.lt.s32.totalorder %s456, 3
        %s458 = scalar_select %p457, %s456, 3
        %s459 = scalar_lea.vmem %s3, %s458
        %p460 = pneg %p130
        %p461 = pneg %p127
        %p462 = pneg %p151
        %p463 = pneg %p148
        %p464 = pneg %p172
        %p465 = pneg %p169
        %p466 = pneg %p193
        %p467 = pneg %p190
        %p468 = pneg %p214
        %p469 = pneg %p211
        %p470 = pneg %p235
        %p471 = pneg %p232
        %p472 = pneg %p256
        %p473 = pneg %p253
        %p474 = pneg %p282
        %p475 = pneg %p279
        %s476 = sand.u32 %s269, 1
        %s477 = scalar_lea.sflag [#allocation4], %s476
        %s478 = sand.u32 %s269, 1
        %s479 = smul.addr %s478, 32
        %s480 = scalar_lea.vmem [#allocation10], %s479
        %s481 = smul.u32 2, %s31
        %s482 = smul.u32 2, %s31
        %s483 = smul.u32 2, %s31
        %p484 = scmp.lt.s32.totalorder %s483, 3
        %s485 = scalar_select %p484, %s483, 3
        %s486 = smul.addr %s485, 2
        %s487 = smul.addr %s486, 4
        %s488 = scalar_lea.vmem %s2, %s487
        %s489 = smul.u32 2, %s31
        %s490 = smul.u32 2, %s31
        %p491 = scmp.lt.s32.totalorder %s490, 3
        %s492 = scalar_select %p491, %s490, 3
        %s493 = scalar_lea.vmem %s3, %s492
        %s494 = smul.u32 2, %s31
        %s495 = smul.u32 2, %s31
        %v496 = vld [vmem:[%s412] sm:$0xff]
        %v497 = vld [vmem:[%s412 + $0x8] sm:$0xff]
        %v498 = vld [vmem:[%s412 + $0x10] sm:$0xff]
        %v499 = vld [vmem:[%s412 + $0x18] sm:$0xff]
        %v500 = vld [vmem:[%s488] sm:$0xf]
        %v501 = vld [vmem:[%s488 + $0x4] sm:$0xf]
        %v502 = vld [vmem:[%s488 + $0x8] sm:$0xf]
        %v503 = vld [vmem:[%s488 + $0xc] sm:$0xf]
        %v504 = vunpack.c.l.bf16 %v500
        %v505 = vunpack.c.l.bf16 %v501
        %v506 = vunpack.c.l.bf16 %v502
        %v507 = vunpack.c.l.bf16 %v503
        %v508 = vld [vmem:[%s421] sm:$0xff]
        %v509 = vld [vmem:[%s421 + $0x8] sm:$0xff]
        %v510 = vld [vmem:[%s421 + $0x10] sm:$0xff]
        %v511 = vld [vmem:[%s421 + $0x18] sm:$0xff]
        %v512 = vld [vmem:[%s6] sm:$0xff]
        %v513 = vld [vmem:[%s6 + $0x8] sm:$0xff]
        %v514 = vld [vmem:[%s6 + $0x10] sm:$0xff]
        %v515 = vld [vmem:[%s6 + $0x18] sm:$0xff]
        %v516 = vld [vmem:[%s7] sm:$0x1]
        %v518 = vlaneseq
        %v519 = vshrl.u32 %v518, 7
        %v520 = vsub.s32 0, %v519
        %v521 = vrot.slane %v516, %v520
        %vm523 = vcmask 261120
        %v525 = vsel %vm523, %v496, 0
        %v528 = vsel %vm523, %v497, 0
        %v531 = vsel %vm523, %v498, 0
        %v534 = vsel %vm523, %v499, 0
        %536 = vmatprep.subr.mxu0 0.0
        %537 = vmatpush1.msra.mxu0 0.0
        %538 = vmatprep.subr.mxu0 0.0
        %539 = vmatpush1.msra.mxu0 0.0
        %540 = vmatprep.subr.mxu0 0.0
        %541 = vmatpush1.msra.mxu0 0.0
        %542 = vmatprep.subr.mxu0 0.0
        %543 = vmatpush1.msra.mxu0 0.0
        %544 = vmatprep.subr.mxu0 0.0
        %545 = vmatpush1.msra.mxu0 0.0
        %546 = vmatprep.subr.mxu0 0.0
        %547 = vmatpush1.msra.mxu0 0.0
        %548 = vmatprep.subr.mxu0 0.0
        %549 = vmatpush1.msra.mxu0 0.0
        %550 = vmatprep.subr.mxu0 0.0
        %551 = vmatpush1.msra.mxu0 0.0
        %552 = vmatprep.subr.mxu0 0.0
        %553 = vmatpush1.msra.mxu0 0.0
        %554 = vmatprep.subr.mxu0 0.0
        %555 = vmatpush1.msra.mxu0 0.0
        %556 = vmatprep.subr.mxu0 0.0
        %557 = vmatpush1.msra.mxu0 0.0
        %558 = vmatprep.subr.mxu0 0.0
        %559 = vmatpush1.msra.mxu0 0.0
        %560 = vmatprep.subr.mxu0 0.0
        %561 = vmatpush1.msra.mxu0 %v515
        %562 = vmatprep.subr.mxu0 0.0
        %563 = vmatpush1.msra.mxu0 %v514
        %564 = vmatprep.subr.mxu0 0.0
        %565 = vmatpush1.msra.mxu0 %v513
        %566 = vmatprep.subr.mxu0 0.0
        %567 = vmatpush1.msra.mxu0 %v512
        %568 = vmatprep.subr.mxu0 0.0
        %569 = vmatpush2.msra.mxu0 0.0
        %570 = vmatprep.subr.mxu0 0.0
        %571 = vmatpush2.msra.mxu0 0.0
        %572 = vmatprep.subr.mxu0 0.0
        %573 = vmatpush2.msra.mxu0 0.0
        %574 = vmatprep.subr.mxu0 0.0
        %575 = vmatpush2.msra.mxu0 0.0
        %576 = vmatprep.subr.mxu0 0.0
        %577 = vmatpush2.msra.mxu0 0.0
        %578 = vmatprep.subr.mxu0 0.0
        %579 = vmatpush2.msra.mxu0 0.0
        %580 = vmatprep.subr.mxu0 0.0
        %581 = vmatpush2.msra.mxu0 0.0
        %582 = vmatprep.subr.mxu0 0.0
        %583 = vmatpush2.msra.mxu0 0.0
        %584 = vmatprep.subr.mxu0 0.0
        %585 = vmatpush2.msra.mxu0 0.0
        %586 = vmatprep.subr.mxu0 0.0
        %587 = vmatpush2.msra.mxu0 0.0
        %588 = vmatprep.subr.mxu0 0.0
        %589 = vmatpush2.msra.mxu0 0.0
        %590 = vmatprep.subr.mxu0 0.0
        %591 = vmatpush2.msra.mxu0 0.0
        %592 = vmatprep.subr.mxu0 0.0
        %593 = vmatpush2.msra.mxu0 0.0
        %594 = vmatprep.subr.mxu0 0.0
        %595 = vmatpush2.msra.mxu0 0.0
        %596 = vmatprep.subr.mxu0 0.0
        %597 = vmatpush2.msra.mxu0 0.0
        %598 = vmatprep.subr.mxu0 0.0
        %599 = vmatpush2.msra.mxu0 0.0
        %600 = vmatprep.mubr.f32.mxu0 0.0
        %601 = vmatmul.mubr.f32.gmra.mxu0 %v525
        %v602 = vpop.f32.mrf.mxu0
        %v603 = vadd.f32 %v521, %v602
        %v604 = vpop.f32.mrf.mxu0
        %605 = vmatprep.mubr.f32.mxu0 0.0
        %606 = vmatmul.mubr.f32.gmra.mxu0 %v528
        %v607 = vpop.f32.mrf.mxu0
        %v608 = vadd.f32 %v521, %v607
        %v609 = vpop.f32.mrf.mxu0
        %610 = vmatprep.mubr.f32.mxu0 0.0
        %611 = vmatmul.mubr.f32.gmra.mxu0 %v531
        %v612 = vpop.f32.mrf.mxu0
        %v613 = vadd.f32 %v521, %v612
        %v614 = vpop.f32.mrf.mxu0
        %615 = vmatprep.mubr.f32.mxu0 0.0
        %616 = vmatmul.mubr.f32.gmra.mxu0 %v534
        %v617 = vpop.f32.mrf.mxu0
        %v618 = vadd.f32 %v521, %v617
        %v619 = vpop.f32.mrf.mxu0
        %620 = vdwg.mxu0
        %v621 = vxor.u32 %v603, 2147483648
        %v622 = vxor.u32 %v608, 2147483648
        %v623 = vxor.u32 %v613, 2147483648
        %v624 = vxor.u32 %v618, 2147483648
        %v625 = vmul.f32 %v621, 1.442695
        %v626 = vpow.pop %v625
        %v627 = vmul.f32 %v622, 1.442695
        %v628 = vpow.pop %v627
        %v629 = vmul.f32 %v623, 1.442695
        %v630 = vpow.pop %v629
        %v631 = vmul.f32 %v624, 1.442695
        %v632 = vpow.pop %v631
        %v633 = vadd.f32 %v626, 1.0
        %v634 = vadd.f32 %v628, 1.0
        %v635 = vadd.f32 %v630, 1.0
        %v636 = vadd.f32 %v632, 1.0
        %v637 = vrcp.pop %v633
        %v638 = vmul.f32 1.0, %v637
        %v639 = vrcp.pop %v634
        %v640 = vmul.f32 1.0, %v639
        %v641 = vrcp.pop %v635
        %v642 = vmul.f32 1.0, %v641
        %v643 = vrcp.pop %v636
        %v644 = vmul.f32 1.0, %v643
        %v645 = vld [vmem:[%s5] sm:$0xff]
        %v646 = vld [vmem:[%s5 + $0x8] sm:$0xff]
        %v647 = vld [vmem:[%s5 + $0x10] sm:$0xff]
        %v648 = vld [vmem:[%s5 + $0x18] sm:$0xff]
        %v650 = vsel %vm523, %v508, 0
        %v653 = vsel %vm523, %v509, 0
        %v656 = vsel %vm523, %v510, 0
        %v659 = vsel %vm523, %v511, 0
        %661 = vmatprep.subr.mxu0 0.0
        %662 = vmatpush1.msra.mxu0 0.0
        %663 = vmatprep.subr.mxu0 0.0
        %664 = vmatpush1.msra.mxu0 0.0
        %665 = vmatprep.subr.mxu0 0.0
        %666 = vmatpush1.msra.mxu0 0.0
        %667 = vmatprep.subr.mxu0 0.0
        %668 = vmatpush1.msra.mxu0 0.0
        %669 = vmatprep.subr.mxu0 0.0
        %670 = vmatpush1.msra.mxu0 0.0
        %671 = vmatprep.subr.mxu0 0.0
        %672 = vmatpush1.msra.mxu0 0.0
        %673 = vmatprep.subr.mxu0 0.0
        %674 = vmatpush1.msra.mxu0 0.0
        %675 = vmatprep.subr.mxu0 0.0
        %676 = vmatpush1.msra.mxu0 0.0
        %677 = vmatprep.subr.mxu0 0.0
        %678 = vmatpush1.msra.mxu0 0.0
        %679 = vmatprep.subr.mxu0 0.0
        %680 = vmatpush1.msra.mxu0 0.0
        %681 = vmatprep.subr.mxu0 0.0
        %682 = vmatpush1.msra.mxu0 0.0
        %683 = vmatprep.subr.mxu0 0.0
        %684 = vmatpush1.msra.mxu0 0.0
        %685 = vmatprep.subr.mxu0 0.0
        %686 = vmatpush1.msra.mxu0 %v648
        %687 = vmatprep.subr.mxu0 0.0
        %688 = vmatpush1.msra.mxu0 %v647
        %689 = vmatprep.subr.mxu0 0.0
        %690 = vmatpush1.msra.mxu0 %v646
        %691 = vmatprep.subr.mxu0 0.0
        %692 = vmatpush1.msra.mxu0 %v645
        %693 = vmatprep.subr.mxu0 0.0
        %694 = vmatpush2.msra.mxu0 0.0
        %695 = vmatprep.subr.mxu0 0.0
        %696 = vmatpush2.msra.mxu0 0.0
        %697 = vmatprep.subr.mxu0 0.0
        %698 = vmatpush2.msra.mxu0 0.0
        %699 = vmatprep.subr.mxu0 0.0
        %700 = vmatpush2.msra.mxu0 0.0
        %701 = vmatprep.subr.mxu0 0.0
        %702 = vmatpush2.msra.mxu0 0.0
        %703 = vmatprep.subr.mxu0 0.0
        %704 = vmatpush2.msra.mxu0 0.0
        %705 = vmatprep.subr.mxu0 0.0
        %706 = vmatpush2.msra.mxu0 0.0
        %707 = vmatprep.subr.mxu0 0.0
        %708 = vmatpush2.msra.mxu0 0.0
        %709 = vmatprep.subr.mxu0 0.0
        %710 = vmatpush2.msra.mxu0 0.0
        %711 = vmatprep.subr.mxu0 0.0
        %712 = vmatpush2.msra.mxu0 0.0
        %713 = vmatprep.subr.mxu0 0.0
        %714 = vmatpush2.msra.mxu0 0.0
        %715 = vmatprep.subr.mxu0 0.0
        %716 = vmatpush2.msra.mxu0 0.0
        %717 = vmatprep.subr.mxu0 0.0
        %718 = vmatpush2.msra.mxu0 0.0
        %719 = vmatprep.subr.mxu0 0.0
        %720 = vmatpush2.msra.mxu0 0.0
        %721 = vmatprep.subr.mxu0 0.0
        %722 = vmatpush2.msra.mxu0 0.0
        %723 = vmatprep.subr.mxu0 0.0
        %724 = vmatpush2.msra.mxu0 0.0
        %725 = vmatprep.mubr.f32.mxu0 0.0
        %726 = vmatmul.mubr.f32.gmra.mxu0 %v650
        %v727 = vpop.f32.mrf.mxu0
        %v728 = vadd.f32 0.0, %v727
        %v729 = vpop.f32.mrf.mxu0
        %730 = vmatprep.mubr.f32.mxu0 0.0
        %731 = vmatmul.mubr.f32.gmra.mxu0 %v653
        %v732 = vpop.f32.mrf.mxu0
        %v733 = vadd.f32 0.0, %v732
        %v734 = vpop.f32.mrf.mxu0
        %735 = vmatprep.mubr.f32.mxu0 0.0
        %736 = vmatmul.mubr.f32.gmra.mxu0 %v656
        %v737 = vpop.f32.mrf.mxu0
        %v738 = vadd.f32 0.0, %v737
        %v739 = vpop.f32.mrf.mxu0
        %740 = vmatprep.mubr.f32.mxu0 0.0
        %741 = vmatmul.mubr.f32.gmra.mxu0 %v659
        %v742 = vpop.f32.mrf.mxu0
        %v743 = vadd.f32 0.0, %v742
        %v744 = vpop.f32.mrf.mxu0
        %745 = vdwg.mxu0
        %v746 = vmul.f32 %v504, %v496
        %v747 = vmul.f32 %v505, %v497
        %v748 = vmul.f32 %v506, %v498
        %v749 = vmul.f32 %v507, %v499
        %v750 = vsel %vm523, %v746, 0.0
        %v751 = vsel %vm523, %v747, 0.0
        %v752 = vadd.f32 %v750, %v751
        %v753 = vrot.slane %v752, 4
        %v754 = vadd.f32 %v752, %v753
        %v755 = vrot.slane %v754, 2
        %v756 = vadd.f32 %v754, %v755
        %v757 = vrot.slane %v756, 1
        %v758 = vadd.f32 %v756, %v757
        %v759 = vsel %vm523, %v748, 0.0
        %v760 = vsel %vm523, %v749, 0.0
        %v761 = vadd.f32 %v759, %v760
        %v762 = vrot.slane %v761, 4
        %v763 = vadd.f32 %v761, %v762
        %v764 = vrot.slane %v763, 2
        %v765 = vadd.f32 %v763, %v764
        %v766 = vrot.slane %v765, 1
        %v767 = vadd.f32 %v765, %v766
        %v768 = vsel %vm523, %v504, 0.0
        %v769 = vsel %vm523, %v505, 0.0
        %v770 = vadd.f32 %v768, %v769
        %v771 = vrot.slane %v770, 4
        %v772 = vadd.f32 %v770, %v771
        %v773 = vrot.slane %v772, 2
        %v774 = vadd.f32 %v772, %v773
        %v775 = vrot.slane %v774, 1
        %v776 = vadd.f32 %v774, %v775
        %v777 = vsel %vm523, %v506, 0.0
        %v778 = vsel %vm523, %v507, 0.0
        %v779 = vadd.f32 %v777, %v778
        %v780 = vrot.slane %v779, 4
        %v781 = vadd.f32 %v779, %v780
        %v782 = vrot.slane %v781, 2
        %v783 = vadd.f32 %v781, %v782
        %v784 = vrot.slane %v783, 1
        %v785 = vadd.f32 %v783, %v784
        %v786 = vadd.f32 %v776, 1e-10
        %v787 = vadd.f32 %v785, 1e-10
        %v788 = vrcp.pop %v786
        %v789 = vrcp.pop %v787
        %v790 = vmul.f32 %v758, %v788
        %v791 = vmul.f32 %v767, %v789
        %v792 = vld [vmem:[#allocation7] sm:$0xff]
        %v793 = vld [vmem:[#allocation7 + $0x8] sm:$0xff]
        %v794 = vld [vmem:[#allocation7 + $0x10] sm:$0xff]
        %v795 = vld [vmem:[#allocation7 + $0x18] sm:$0xff]
        %vm798 = vcmask 1041409
        %v799 = vsel %vm798, %v791, %v790
        %v800 = vsel %vm523, %v799, 0
        %802 = vmatprep.subr.mxu0 0.0
        %803 = vmatpush1.msra.mxu0 0.0
        %804 = vmatprep.subr.mxu0 0.0
        %805 = vmatpush1.msra.mxu0 0.0
        %806 = vmatprep.subr.mxu0 0.0
        %807 = vmatpush1.msra.mxu0 0.0
        %808 = vmatprep.subr.mxu0 0.0
        %809 = vmatpush1.msra.mxu0 0.0
        %810 = vmatprep.subr.mxu0 0.0
        %811 = vmatpush1.msra.mxu0 0.0
        %812 = vmatprep.subr.mxu0 0.0
        %813 = vmatpush1.msra.mxu0 0.0
        %814 = vmatprep.subr.mxu0 0.0
        %815 = vmatpush1.msra.mxu0 0.0
        %816 = vmatprep.subr.mxu0 0.0
        %817 = vmatpush1.msra.mxu0 0.0
        %818 = vmatprep.subr.mxu0 0.0
        %819 = vmatpush1.msra.mxu0 0.0
        %820 = vmatprep.subr.mxu0 0.0
        %821 = vmatpush1.msra.mxu0 0.0
        %822 = vmatprep.subr.mxu0 0.0
        %823 = vmatpush1.msra.mxu0 0.0
        %824 = vmatprep.subr.mxu0 0.0
        %825 = vmatpush1.msra.mxu0 0.0
        %826 = vmatprep.subr.mxu0 0.0
        %827 = vmatpush1.msra.mxu0 %v795
        %828 = vmatprep.subr.mxu0 0.0
        %829 = vmatpush1.msra.mxu0 %v794
        %830 = vmatprep.subr.mxu0 0.0
        %831 = vmatpush1.msra.mxu0 %v793
        %832 = vmatprep.subr.mxu0 0.0
        %833 = vmatpush1.msra.mxu0 %v792
        %834 = vmatprep.subr.mxu0 0.0
        %835 = vmatpush2.msra.mxu0 0.0
        %836 = vmatprep.subr.mxu0 0.0
        %837 = vmatpush2.msra.mxu0 0.0
        %838 = vmatprep.subr.mxu0 0.0
        %839 = vmatpush2.msra.mxu0 0.0
        %840 = vmatprep.subr.mxu0 0.0
        %841 = vmatpush2.msra.mxu0 0.0
        %842 = vmatprep.subr.mxu0 0.0
        %843 = vmatpush2.msra.mxu0 0.0
        %844 = vmatprep.subr.mxu0 0.0
        %845 = vmatpush2.msra.mxu0 0.0
        %846 = vmatprep.subr.mxu0 0.0
        %847 = vmatpush2.msra.mxu0 0.0
        %848 = vmatprep.subr.mxu0 0.0
        %849 = vmatpush2.msra.mxu0 0.0
        %850 = vmatprep.subr.mxu0 0.0
        %851 = vmatpush2.msra.mxu0 0.0
        %852 = vmatprep.subr.mxu0 0.0
        %853 = vmatpush2.msra.mxu0 0.0
        %854 = vmatprep.subr.mxu0 0.0
        %855 = vmatpush2.msra.mxu0 0.0
        %856 = vmatprep.subr.mxu0 0.0
        %857 = vmatpush2.msra.mxu0 0.0
        %858 = vmatprep.subr.mxu0 0.0
        %859 = vmatpush2.msra.mxu0 0.0
        %860 = vmatprep.subr.mxu0 0.0
        %861 = vmatpush2.msra.mxu0 0.0
        %862 = vmatprep.subr.mxu0 0.0
        %863 = vmatpush2.msra.mxu0 0.0
        %864 = vmatprep.subr.mxu0 0.0
        %865 = vmatpush2.msra.mxu0 0.0
        %866 = vmatprep.mubr.f32.mxu0 0.0
        %867 = vmatmul.mubr.f32.gmra.mxu0 %v800
        %v868 = vpop.f32.mrf.mxu0
        %v869 = vadd.f32 0.0, %v868
        %v870 = vpop.f32.mrf.mxu0
        %871 = vdwg.mxu0
        %873 = vrot.lane.b32.xlu0 %v869, 120
        %v874 = vpop.permute.xlu0 %873
        %876 = vrot.lane.b32.xlu0 %v869, 112
        %v877 = vpop.permute.xlu0 %876
        %879 = vrot.lane.b32.xlu0 %v869, 104
        %v880 = vpop.permute.xlu0 %879
        %v882 = vcombine.low %v869, %v877
        %v884 = vunpack.c.l.s4 1983009808
        %v885 = vunpack.c.0.s8 %v884
        %v886 = vlaneseq
        %v887 = vshrl.u32 %v886, 7
        %v888 = vsub.s32 %v885, %v887
        %v889 = vrot.slane %v882, %v888
        %v890 = vcombine.low %v874, %v880
        %v892 = vunpack.c.l.s4 1983009808
        %v893 = vunpack.c.0.s8 %v892
        %v894 = vlaneseq
        %v895 = vshrl.u32 %v894, 7
        %v896 = vsub.s32 %v893, %v895
        %v897 = vrot.slane %v890, %v896
        %v898 = vcombine.low %v889, %v897
        %v900 = vunpack.c.l.s4 1934713408
        %v901 = vunpack.c.0.s8 %v900
        %v902 = vlaneseq
        %v903 = vshrl.u32 %v902, 7
        %v904 = vsub.s32 %v901, %v903
        %v905 = vrot.slane %v898, %v904
        %v906 = vcombine.high %v905, 0.0
        %v907 = vld [vmem:[%s493] sm:$0x1]
        %v908 = vld [vmem:[%s493 + $0x1] sm:$0x1]
        %v909 = vunpack.c.l.bf16 %v907
        %v910 = vunpack.c.l.bf16 %v908
        %v911 = vsub.f32 %v909, 1.0
        %v912 = vsub.f32 %v910, 1.0
        %v913 = vmul.f32 %v911, 1e+09
        %v914 = vmul.f32 %v912, 1e+09
        %v915 = vlaneseq
        %v916 = vshrl.u32 %v915, 7
        %v917 = vsub.s32 0, %v916
        %v918 = vrot.slane %v913, %v917
        %v919 = vlaneseq
        %v920 = vshrl.u32 %v919, 7
        %v921 = vsub.s32 0, %v920
        %v922 = vrot.slane %v914, %v921
        %vm923 = vcmask 64512
        %v925 = vsel %vm923, %v905, 0
        %v928 = vsel %vm923, %v728, 0
        %v931 = vsel %vm923, %v733, 0
        %933 = vmatprep.subr.mxu0 0.0
        %934 = vmatpush1.xpose.msra.mxu0 0.0
        %935 = vmatprep.subr.mxu0 0.0
        %936 = vmatpush1.xpose.msra.mxu0 0.0
        %937 = vmatprep.subr.mxu0 0.0
        %938 = vmatpush1.xpose.msra.mxu0 0.0
        %939 = vmatprep.subr.mxu0 0.0
        %940 = vmatpush1.xpose.msra.mxu0 0.0
        %941 = vmatprep.subr.mxu0 0.0
        %942 = vmatpush1.xpose.msra.mxu0 0.0
        %943 = vmatprep.subr.mxu0 0.0
        %944 = vmatpush1.xpose.msra.mxu0 0.0
        %945 = vmatprep.subr.mxu0 0.0
        %946 = vmatpush1.xpose.msra.mxu0 0.0
        %947 = vmatprep.subr.mxu0 0.0
        %948 = vmatpush1.xpose.msra.mxu0 0.0
        %949 = vmatprep.subr.mxu0 0.0
        %950 = vmatpush1.xpose.msra.mxu0 0.0
        %951 = vmatprep.subr.mxu0 0.0
        %952 = vmatpush1.xpose.msra.mxu0 0.0
        %953 = vmatprep.subr.mxu0 0.0
        %954 = vmatpush1.xpose.msra.mxu0 0.0
        %955 = vmatprep.subr.mxu0 0.0
        %956 = vmatpush1.xpose.msra.mxu0 0.0
        %957 = vmatprep.subr.mxu0 0.0
        %958 = vmatpush1.xpose.msra.mxu0 0.0
        %959 = vmatprep.subr.mxu0 0.0
        %960 = vmatpush1.xpose.msra.mxu0 0.0
        %961 = vmatprep.subr.mxu0 0.0
        %962 = vmatpush1.xpose.msra.mxu0 %v931
        %963 = vmatprep.subr.mxu0 0.0
        %964 = vmatpush1.xpose.msra.mxu0 %v928
        %965 = vmatprep.subr.mxu0 0.0
        %966 = vmatpush2.xpose.msra.mxu0 0.0
        %967 = vmatprep.subr.mxu0 0.0
        %968 = vmatpush2.xpose.msra.mxu0 0.0
        %969 = vmatprep.subr.mxu0 0.0
        %970 = vmatpush2.xpose.msra.mxu0 0.0
        %971 = vmatprep.subr.mxu0 0.0
        %972 = vmatpush2.xpose.msra.mxu0 0.0
        %973 = vmatprep.subr.mxu0 0.0
        %974 = vmatpush2.xpose.msra.mxu0 0.0
        %975 = vmatprep.subr.mxu0 0.0
        %976 = vmatpush2.xpose.msra.mxu0 0.0
        %977 = vmatprep.subr.mxu0 0.0
        %978 = vmatpush2.xpose.msra.mxu0 0.0
        %979 = vmatprep.subr.mxu0 0.0
        %980 = vmatpush2.xpose.msra.mxu0 0.0
        %981 = vmatprep.subr.mxu0 0.0
        %982 = vmatpush2.xpose.msra.mxu0 0.0
        %983 = vmatprep.subr.mxu0 0.0
        %984 = vmatpush2.xpose.msra.mxu0 0.0
        %985 = vmatprep.subr.mxu0 0.0
        %986 = vmatpush2.xpose.msra.mxu0 0.0
        %987 = vmatprep.subr.mxu0 0.0
        %988 = vmatpush2.xpose.msra.mxu0 0.0
        %989 = vmatprep.subr.mxu0 0.0
        %990 = vmatpush2.xpose.msra.mxu0 0.0
        %991 = vmatprep.subr.mxu0 0.0
        %992 = vmatpush2.xpose.msra.mxu0 0.0
        %993 = vmatprep.subr.mxu0 0.0
        %994 = vmatpush2.xpose.msra.mxu0 0.0
        %995 = vmatprep.subr.mxu0 0.0
        %996 = vmatpush2.xpose.msra.mxu0 0.0
        %997 = vmatprep.mubr.f32.mxu0 0.0
        %998 = vmatmul.mubr.f32.gmra.mxu0 %v925
        %v999 = vpop.f32.mrf.mxu0
        %v1000 = vadd.f32 %v918, %v999
        %v1001 = vpop.f32.mrf.mxu0
        %1002 = vdwg.mxu0
        %v1004 = vsel %vm923, %v906, 0
        %v1007 = vsel %vm923, %v738, 0
        %v1010 = vsel %vm923, %v743, 0
        %1012 = vmatprep.subr.mxu0 0.0
        %1013 = vmatpush1.xpose.msra.mxu0 0.0
        %1014 = vmatprep.subr.mxu0 0.0
        %1015 = vmatpush1.xpose.msra.mxu0 0.0
        %1016 = vmatprep.subr.mxu0 0.0
        %1017 = vmatpush1.xpose.msra.mxu0 0.0
        %1018 = vmatprep.subr.mxu0 0.0
        %1019 = vmatpush1.xpose.msra.mxu0 0.0
        %1020 = vmatprep.subr.mxu0 0.0
        %1021 = vmatpush1.xpose.msra.mxu0 0.0
        %1022 = vmatprep.subr.mxu0 0.0
        %1023 = vmatpush1.xpose.msra.mxu0 0.0
        %1024 = vmatprep.subr.mxu0 0.0
        %1025 = vmatpush1.xpose.msra.mxu0 0.0
        %1026 = vmatprep.subr.mxu0 0.0
        %1027 = vmatpush1.xpose.msra.mxu0 0.0
        %1028 = vmatprep.subr.mxu0 0.0
        %1029 = vmatpush1.xpose.msra.mxu0 0.0
        %1030 = vmatprep.subr.mxu0 0.0
        %1031 = vmatpush1.xpose.msra.mxu0 0.0
        %1032 = vmatprep.subr.mxu0 0.0
        %1033 = vmatpush1.xpose.msra.mxu0 0.0
        %1034 = vmatprep.subr.mxu0 0.0
        %1035 = vmatpush1.xpose.msra.mxu0 0.0
        %1036 = vmatprep.subr.mxu0 0.0
        %1037 = vmatpush1.xpose.msra.mxu0 0.0
        %1038 = vmatprep.subr.mxu0 0.0
        %1039 = vmatpush1.xpose.msra.mxu0 0.0
        %1040 = vmatprep.subr.mxu0 0.0
        %1041 = vmatpush1.xpose.msra.mxu0 %v1010
        %1042 = vmatprep.subr.mxu0 0.0
        %1043 = vmatpush1.xpose.msra.mxu0 %v1007
        %1044 = vmatprep.subr.mxu0 0.0
        %1045 = vmatpush2.xpose.msra.mxu0 0.0
        %1046 = vmatprep.subr.mxu0 0.0
        %1047 = vmatpush2.xpose.msra.mxu0 0.0
        %1048 = vmatprep.subr.mxu0 0.0
        %1049 = vmatpush2.xpose.msra.mxu0 0.0
        %1050 = vmatprep.subr.mxu0 0.0
        %1051 = vmatpush2.xpose.msra.mxu0 0.0
        %1052 = vmatprep.subr.mxu0 0.0
        %1053 = vmatpush2.xpose.msra.mxu0 0.0
        %1054 = vmatprep.subr.mxu0 0.0
        %1055 = vmatpush2.xpose.msra.mxu0 0.0
        %1056 = vmatprep.subr.mxu0 0.0
        %1057 = vmatpush2.xpose.msra.mxu0 0.0
        %1058 = vmatprep.subr.mxu0 0.0
        %1059 = vmatpush2.xpose.msra.mxu0 0.0
        %1060 = vmatprep.subr.mxu0 0.0
        %1061 = vmatpush2.xpose.msra.mxu0 0.0
        %1062 = vmatprep.subr.mxu0 0.0
        %1063 = vmatpush2.xpose.msra.mxu0 0.0
        %1064 = vmatprep.subr.mxu0 0.0
        %1065 = vmatpush2.xpose.msra.mxu0 0.0
        %1066 = vmatprep.subr.mxu0 0.0
        %1067 = vmatpush2.xpose.msra.mxu0 0.0
        %1068 = vmatprep.subr.mxu0 0.0
        %1069 = vmatpush2.xpose.msra.mxu0 0.0
        %1070 = vmatprep.subr.mxu0 0.0
        %1071 = vmatpush2.xpose.msra.mxu0 0.0
        %1072 = vmatprep.subr.mxu0 0.0
        %1073 = vmatpush2.xpose.msra.mxu0 0.0
        %1074 = vmatprep.subr.mxu0 0.0
        %1075 = vmatpush2.xpose.msra.mxu0 0.0
        %1076 = vmatprep.mubr.f32.mxu0 0.0
        %1077 = vmatmul.mubr.f32.gmra.mxu0 %v1004
        %v1078 = vpop.f32.mrf.mxu0
        %v1079 = vadd.f32 %v922, %v1078
        %v1080 = vpop.f32.mrf.mxu0
        %1081 = vdwg.mxu0
        %vm1082 = vcmask 125952
        %v1083 = vsel %vm1082, %v1000, -inf
        %1084 = vmax.xlane.f32.xlu0 %v1083
        %v1085 = vpop.xlane.xlu0 %1084
        %v1086 = vsel %vm1082, %v1079, -inf
        %1087 = vmax.xlane.f32.xlu0 %v1086
        %v1088 = vpop.xlane.xlu0 %1087
        %v1089 = vsub.f32 %v1000, %v1085
        %v1090 = vsub.f32 %v1079, %v1088
        %v1091 = vmul.f32 %v1089, 1.442695
        %v1092 = vpow.pop %v1091
        %v1093 = vmul.f32 %v1090, 1.442695
        %v1094 = vpow.pop %v1093
        %v1095 = vsel %vm1082, %v1092, 0.0
        %1096 = vadd.xlane.f32.xlu0 %v1095
        %v1097 = vpop.xlane.xlu0 %1096
        %v1098 = vsel %vm1082, %v1094, 0.0
        %1099 = vadd.xlane.f32.xlu0 %v1098
        %v1100 = vpop.xlane.xlu0 %1099
        %v1101 = vrcp.pop %v1097
        %v1102 = vrcp.pop %v1100
        %v1103 = vmul.f32 %v1092, %v1101
        %v1104 = vmul.f32 %v1094, %v1102
        %1105 = vrot.lane.b32.xlu0 %v728, 120
        %v1106 = vpop.permute.xlu0 %1105
        %1107 = vrot.lane.b32.xlu0 %v733, 120
        %v1108 = vpop.permute.xlu0 %1107
        %vm1111 = vcmask 130048
        %v1113 = vsel %vm1111, %v1103, 0
        %1115 = vmatprep.subr.mxu0 0.0
        %1116 = vmatpush1.msra.mxu0 0.0
        %1117 = vmatprep.subr.mxu0 0.0
        %1118 = vmatpush1.msra.mxu0 0.0
        %1119 = vmatprep.subr.mxu0 0.0
        %1120 = vmatpush1.msra.mxu0 0.0
        %1121 = vmatprep.subr.mxu0 0.0
        %1122 = vmatpush1.msra.mxu0 0.0
        %1123 = vmatprep.subr.mxu0 0.0
        %1124 = vmatpush1.msra.mxu0 0.0
        %1125 = vmatprep.subr.mxu0 0.0
        %1126 = vmatpush1.msra.mxu0 0.0
        %1127 = vmatprep.subr.mxu0 0.0
        %1128 = vmatpush1.msra.mxu0 0.0
        %1129 = vmatprep.subr.mxu0 0.0
        %1130 = vmatpush1.msra.mxu0 0.0
        %1131 = vmatprep.subr.mxu0 0.0
        %1132 = vmatpush1.msra.mxu0 0.0
        %1133 = vmatprep.subr.mxu0 0.0
        %1134 = vmatpush1.msra.mxu0 0.0
        %1135 = vmatprep.subr.mxu0 0.0
        %1136 = vmatpush1.msra.mxu0 0.0
        %1137 = vmatprep.subr.mxu0 0.0
        %1138 = vmatpush1.msra.mxu0 0.0
        %1139 = vmatprep.subr.mxu0 0.0
        %1140 = vmatpush1.msra.mxu0 0.0
        %1141 = vmatprep.subr.mxu0 0.0
        %1142 = vmatpush1.msra.mxu0 0.0
        %1143 = vmatprep.subr.mxu0 0.0
        %1144 = vmatpush1.msra.mxu0 %v1108
        %1145 = vmatprep.subr.mxu0 0.0
        %1146 = vmatpush1.msra.mxu0 %v1106
        %1147 = vmatprep.subr.mxu0 0.0
        %1148 = vmatpush2.msra.mxu0 0.0
        %1149 = vmatprep.subr.mxu0 0.0
        %1150 = vmatpush2.msra.mxu0 0.0
        %1151 = vmatprep.subr.mxu0 0.0
        %1152 = vmatpush2.msra.mxu0 0.0
        %1153 = vmatprep.subr.mxu0 0.0
        %1154 = vmatpush2.msra.mxu0 0.0
        %1155 = vmatprep.subr.mxu0 0.0
        %1156 = vmatpush2.msra.mxu0 0.0
        %1157 = vmatprep.subr.mxu0 0.0
        %1158 = vmatpush2.msra.mxu0 0.0
        %1159 = vmatprep.subr.mxu0 0.0
        %1160 = vmatpush2.msra.mxu0 0.0
        %1161 = vmatprep.subr.mxu0 0.0
        %1162 = vmatpush2.msra.mxu0 0.0
        %1163 = vmatprep.subr.mxu0 0.0
        %1164 = vmatpush2.msra.mxu0 0.0
        %1165 = vmatprep.subr.mxu0 0.0
        %1166 = vmatpush2.msra.mxu0 0.0
        %1167 = vmatprep.subr.mxu0 0.0
        %1168 = vmatpush2.msra.mxu0 0.0
        %1169 = vmatprep.subr.mxu0 0.0
        %1170 = vmatpush2.msra.mxu0 0.0
        %1171 = vmatprep.subr.mxu0 0.0
        %1172 = vmatpush2.msra.mxu0 0.0
        %1173 = vmatprep.subr.mxu0 0.0
        %1174 = vmatpush2.msra.mxu0 0.0
        %1175 = vmatprep.subr.mxu0 0.0
        %1176 = vmatpush2.msra.mxu0 0.0
        %1177 = vmatprep.subr.mxu0 0.0
        %1178 = vmatpush2.msra.mxu0 0.0
        %1179 = vmatprep.mubr.f32.mxu0 0.0
        %1180 = vmatmul.mubr.f32.gmra.mxu0 %v1113
        %v1181 = vpop.f32.mrf.mxu0
        %v1182 = vadd.f32 0.0, %v1181
        %v1183 = vpop.f32.mrf.mxu0
        %1184 = vdwg.mxu0
        %1185 = vrot.lane.b32.xlu0 %v738, 120
        %v1186 = vpop.permute.xlu0 %1185
        %1187 = vrot.lane.b32.xlu0 %v743, 120
        %v1188 = vpop.permute.xlu0 %1187
        %v1192 = vsel %vm1111, %v1104, 0
        %1194 = vmatprep.subr.mxu0 0.0
        %1195 = vmatpush1.msra.mxu0 0.0
        %1196 = vmatprep.subr.mxu0 0.0
        %1197 = vmatpush1.msra.mxu0 0.0
        %1198 = vmatprep.subr.mxu0 0.0
        %1199 = vmatpush1.msra.mxu0 0.0
        %1200 = vmatprep.subr.mxu0 0.0
        %1201 = vmatpush1.msra.mxu0 0.0
        %1202 = vmatprep.subr.mxu0 0.0
        %1203 = vmatpush1.msra.mxu0 0.0
        %1204 = vmatprep.subr.mxu0 0.0
        %1205 = vmatpush1.msra.mxu0 0.0
        %1206 = vmatprep.subr.mxu0 0.0
        %1207 = vmatpush1.msra.mxu0 0.0
        %1208 = vmatprep.subr.mxu0 0.0
        %1209 = vmatpush1.msra.mxu0 0.0
        %1210 = vmatprep.subr.mxu0 0.0
        %1211 = vmatpush1.msra.mxu0 0.0
        %1212 = vmatprep.subr.mxu0 0.0
        %1213 = vmatpush1.msra.mxu0 0.0
        %1214 = vmatprep.subr.mxu0 0.0
        %1215 = vmatpush1.msra.mxu0 0.0
        %1216 = vmatprep.subr.mxu0 0.0
        %1217 = vmatpush1.msra.mxu0 0.0
        %1218 = vmatprep.subr.mxu0 0.0
        %1219 = vmatpush1.msra.mxu0 0.0
        %1220 = vmatprep.subr.mxu0 0.0
        %1221 = vmatpush1.msra.mxu0 0.0
        %1222 = vmatprep.subr.mxu0 0.0
        %1223 = vmatpush1.msra.mxu0 %v1188
        %1224 = vmatprep.subr.mxu0 0.0
        %1225 = vmatpush1.msra.mxu0 %v1186
        %1226 = vmatprep.subr.mxu0 0.0
        %1227 = vmatpush2.msra.mxu0 0.0
        %1228 = vmatprep.subr.mxu0 0.0
        %1229 = vmatpush2.msra.mxu0 0.0
        %1230 = vmatprep.subr.mxu0 0.0
        %1231 = vmatpush2.msra.mxu0 0.0
        %1232 = vmatprep.subr.mxu0 0.0
        %1233 = vmatpush2.msra.mxu0 0.0
        %1234 = vmatprep.subr.mxu0 0.0
        %1235 = vmatpush2.msra.mxu0 0.0
        %1236 = vmatprep.subr.mxu0 0.0
        %1237 = vmatpush2.msra.mxu0 0.0
        %1238 = vmatprep.subr.mxu0 0.0
        %1239 = vmatpush2.msra.mxu0 0.0
        %1240 = vmatprep.subr.mxu0 0.0
        %1241 = vmatpush2.msra.mxu0 0.0
        %1242 = vmatprep.subr.mxu0 0.0
        %1243 = vmatpush2.msra.mxu0 0.0
        %1244 = vmatprep.subr.mxu0 0.0
        %1245 = vmatpush2.msra.mxu0 0.0
        %1246 = vmatprep.subr.mxu0 0.0
        %1247 = vmatpush2.msra.mxu0 0.0
        %1248 = vmatprep.subr.mxu0 0.0
        %1249 = vmatpush2.msra.mxu0 0.0
        %1250 = vmatprep.subr.mxu0 0.0
        %1251 = vmatpush2.msra.mxu0 0.0
        %1252 = vmatprep.subr.mxu0 0.0
        %1253 = vmatpush2.msra.mxu0 0.0
        %1254 = vmatprep.subr.mxu0 0.0
        %1255 = vmatpush2.msra.mxu0 0.0
        %1256 = vmatprep.subr.mxu0 0.0
        %1257 = vmatpush2.msra.mxu0 0.0
        %1258 = vmatprep.mubr.f32.mxu0 0.0
        %1259 = vmatmul.mubr.f32.gmra.mxu0 %v1192
        %v1260 = vpop.f32.mrf.mxu0
        %v1261 = vadd.f32 0.0, %v1260
        %v1262 = vpop.f32.mrf.mxu0
        %1263 = vdwg.mxu0
        %v1265 = vunpack.c.l.s4 1983009808
        %v1266 = vunpack.c.0.s8 %v1265
        %v1267 = vlaneseq
        %v1268 = vshrl.u32 %v1267, 7
        %v1269 = vsub.s32 %v1266, %v1268
        %v1270 = vrot.slane %v1182, %v1269
        %v1271 = vcombine.high %v1270, 0.0
        %v1273 = vunpack.c.l.s4 1934713408
        %v1274 = vunpack.c.0.s8 %v1273
        %v1275 = vlaneseq
        %v1276 = vshrl.u32 %v1275, 7
        %v1277 = vsub.s32 %v1274, %v1276
        %v1278 = vrot.slane %v1270, %v1277
        %v1280 = vunpack.c.l.s4 1934713408
        %v1281 = vunpack.c.0.s8 %v1280
        %v1282 = vlaneseq
        %v1283 = vshrl.u32 %v1282, 7
        %v1284 = vsub.s32 %v1281, %v1283
        %v1285 = vrot.slane %v1271, %v1284
        %v1286 = vcombine.high %v1278, 0.0
        %v1287 = vcombine.high %v1285, 0.0
        %v1289 = vunpack.c.l.s4 1983009808
        %v1290 = vunpack.c.0.s8 %v1289
        %v1291 = vlaneseq
        %v1292 = vshrl.u32 %v1291, 7
        %v1293 = vsub.s32 %v1290, %v1292
        %v1294 = vrot.slane %v1261, %v1293
        %v1295 = vcombine.high %v1294, 0.0
        %v1297 = vunpack.c.l.s4 1934713408
        %v1298 = vunpack.c.0.s8 %v1297
        %v1299 = vlaneseq
        %v1300 = vshrl.u32 %v1299, 7
        %v1301 = vsub.s32 %v1298, %v1300
        %v1302 = vrot.slane %v1294, %v1301
        %v1304 = vunpack.c.l.s4 1934713408
        %v1305 = vunpack.c.0.s8 %v1304
        %v1306 = vlaneseq
        %v1307 = vshrl.u32 %v1306, 7
        %v1308 = vsub.s32 %v1305, %v1307
        %v1309 = vrot.slane %v1295, %v1308
        %v1310 = vcombine.high %v1302, 0.0
        %v1311 = vcombine.high %v1309, 0.0
        %1314 = vrot.lane.b32.xlu0 %v1286, 8
        %v1315 = vpop.permute.xlu0 %1314
        %1316 = vrot.lane.b32.xlu0 %v1310, 8
        %v1317 = vpop.permute.xlu0 %1316
        %1322 = vrot.lane.b32.xlu0 %v1285, 16
        %v1323 = vpop.permute.xlu0 %1322
        %1324 = vrot.lane.b32.xlu0 %v1309, 16
        %v1325 = vpop.permute.xlu0 %1324
        %1330 = vrot.lane.b32.xlu0 %v1287, 24
        %v1331 = vpop.permute.xlu0 %1330
        %1332 = vrot.lane.b32.xlu0 %v1311, 24
        %v1333 = vpop.permute.xlu0 %1332
        %v1336 = vsel %vm923, %v1278, %v1315
        %v1337 = vsel %vm923, %v1302, %v1317
        %v1338 = vsel %vm1111, %v1336, %v1323
        %v1339 = vsel %vm1111, %v1337, %v1325
        %vm1340 = vcmask 195584
        %v1341 = vsel %vm1340, %v1338, %v1331
        %v1342 = vsel %vm1340, %v1339, %v1333
        %v1343 = vlaneseq
        %v1344 = vshrl.u32 %v1343, 7
        %v1345 = vsub.s32 0, %v1344
        %v1346 = vrot.slane %v1341, %v1345
        %v1347 = vlaneseq
        %v1348 = vshrl.u32 %v1347, 7
        %v1349 = vsub.s32 0, %v1348
        %v1350 = vrot.slane %v1342, %v1349
        %v1351 = vmul.f32 %v638, %v1346
        %v1352 = vmul.f32 %v640, %v1346
        %v1353 = vmul.f32 %v642, %v1350
        %v1354 = vmul.f32 %v644, %v1350
        %v1355 = vld [vmem:[#allocation8] sm:$0xff]
        %v1356 = vld [vmem:[#allocation8 + $0x8] sm:$0xff]
        %v1357 = vld [vmem:[#allocation8 + $0x10] sm:$0xff]
        %v1358 = vld [vmem:[#allocation8 + $0x18] sm:$0xff]
        %v1359 = vld [vmem:[%s9] sm:$0x1]
        %v1361 = vlaneseq
        %v1362 = vshrl.u32 %v1361, 7
        %v1363 = vsub.s32 0, %v1362
        %v1364 = vrot.slane %v1359, %v1363
        %v1367 = vsel %vm523, %v1351, 0
        %v1370 = vsel %vm523, %v1352, 0
        %v1373 = vsel %vm523, %v1353, 0
        %v1376 = vsel %vm523, %v1354, 0
        %1378 = vmatprep.subr.mxu0 0.0
        %1379 = vmatpush1.msra.mxu0 0.0
        %1380 = vmatprep.subr.mxu0 0.0
        %1381 = vmatpush1.msra.mxu0 0.0
        %1382 = vmatprep.subr.mxu0 0.0
        %1383 = vmatpush1.msra.mxu0 0.0
        %1384 = vmatprep.subr.mxu0 0.0
        %1385 = vmatpush1.msra.mxu0 0.0
        %1386 = vmatprep.subr.mxu0 0.0
        %1387 = vmatpush1.msra.mxu0 0.0
        %1388 = vmatprep.subr.mxu0 0.0
        %1389 = vmatpush1.msra.mxu0 0.0
        %1390 = vmatprep.subr.mxu0 0.0
        %1391 = vmatpush1.msra.mxu0 0.0
        %1392 = vmatprep.subr.mxu0 0.0
        %1393 = vmatpush1.msra.mxu0 0.0
        %1394 = vmatprep.subr.mxu0 0.0
        %1395 = vmatpush1.msra.mxu0 0.0
        %1396 = vmatprep.subr.mxu0 0.0
        %1397 = vmatpush1.msra.mxu0 0.0
        %1398 = vmatprep.subr.mxu0 0.0
        %1399 = vmatpush1.msra.mxu0 0.0
        %1400 = vmatprep.subr.mxu0 0.0
        %1401 = vmatpush1.msra.mxu0 0.0
        %1402 = vmatprep.subr.mxu0 0.0
        %1403 = vmatpush1.msra.mxu0 %v1358
        %1404 = vmatprep.subr.mxu0 0.0
        %1405 = vmatpush1.msra.mxu0 %v1357
        %1406 = vmatprep.subr.mxu0 0.0
        %1407 = vmatpush1.msra.mxu0 %v1356
        %1408 = vmatprep.subr.mxu0 0.0
        %1409 = vmatpush1.msra.mxu0 %v1355
        %1410 = vmatprep.subr.mxu0 0.0
        %1411 = vmatpush2.msra.mxu0 0.0
        %1412 = vmatprep.subr.mxu0 0.0
        %1413 = vmatpush2.msra.mxu0 0.0
        %1414 = vmatprep.subr.mxu0 0.0
        %1415 = vmatpush2.msra.mxu0 0.0
        %1416 = vmatprep.subr.mxu0 0.0
        %1417 = vmatpush2.msra.mxu0 0.0
        %1418 = vmatprep.subr.mxu0 0.0
        %1419 = vmatpush2.msra.mxu0 0.0
        %1420 = vmatprep.subr.mxu0 0.0
        %1421 = vmatpush2.msra.mxu0 0.0
        %1422 = vmatprep.subr.mxu0 0.0
        %1423 = vmatpush2.msra.mxu0 0.0
        %1424 = vmatprep.subr.mxu0 0.0
        %1425 = vmatpush2.msra.mxu0 0.0
        %1426 = vmatprep.subr.mxu0 0.0
        %1427 = vmatpush2.msra.mxu0 0.0
        %1428 = vmatprep.subr.mxu0 0.0
        %1429 = vmatpush2.msra.mxu0 0.0
        %1430 = vmatprep.subr.mxu0 0.0
        %1431 = vmatpush2.msra.mxu0 0.0
        %1432 = vmatprep.subr.mxu0 0.0
        %1433 = vmatpush2.msra.mxu0 0.0
        %1434 = vmatprep.subr.mxu0 0.0
        %1435 = vmatpush2.msra.mxu0 0.0
        %1436 = vmatprep.subr.mxu0 0.0
        %1437 = vmatpush2.msra.mxu0 0.0
        %1438 = vmatprep.subr.mxu0 0.0
        %1439 = vmatpush2.msra.mxu0 0.0
        %1440 = vmatprep.subr.mxu0 0.0
        %1441 = vmatpush2.msra.mxu0 0.0
        %1442 = vmatprep.mubr.f32.mxu0 0.0
        %1443 = vmatmul.mubr.f32.gmra.mxu0 %v1367
        %v1444 = vpop.f32.mrf.mxu0
        %v1445 = vadd.f32 %v1364, %v1444
        %v1446 = vpop.f32.mrf.mxu0
        %1447 = vmatprep.mubr.f32.mxu0 0.0
        %1448 = vmatmul.mubr.f32.gmra.mxu0 %v1370
        %v1449 = vpop.f32.mrf.mxu0
        %v1450 = vadd.f32 %v1364, %v1449
        %v1451 = vpop.f32.mrf.mxu0
        %1452 = vmatprep.mubr.f32.mxu0 0.0
        %1453 = vmatmul.mubr.f32.gmra.mxu0 %v1373
        %v1454 = vpop.f32.mrf.mxu0
        %v1455 = vadd.f32 %v1364, %v1454
        %v1456 = vpop.f32.mrf.mxu0
        %1457 = vmatprep.mubr.f32.mxu0 0.0
        %1458 = vmatmul.mubr.f32.gmra.mxu0 %v1376
        %v1459 = vpop.f32.mrf.mxu0
        %v1460 = vadd.f32 %v1364, %v1459
        %v1461 = vpop.f32.mrf.mxu0
        %1462 = vdwg.mxu0
        %1463 = vst.msk [vmem:[%s480] sm:$0xff] %vm523, %v1445
        %1464 = vst.msk [vmem:[%s480 + $0x8] sm:$0xff] %vm523, %v1450
        %1465 = vst.msk [vmem:[%s480 + $0x10] sm:$0xff] %vm523, %v1455
        %1466 = vst.msk [vmem:[%s480 + $0x18] sm:$0xff] %vm523, %v1460
        %s1467 = sand.u32 %s269, 1
        %s1468 = scalar_lea.sflag [#allocation4], %s1467
        %s1469 = sand.u32 %s269, 1
        %s1470 = smul.addr %s1469, 32
        %s1471 = scalar_lea.vmem [#allocation10], %s1470
        // Predicated region
        $region77: #{tpu_custom_call.1} parent=59 // pred_check
          %p1472 = pneg %p279
        $region78: #{tpu_custom_call.1} parent=59 // pred_check_branch
          %1474 = sbr.rel (%p1472) target = $region80
        $region79: #{tpu_custom_call.1} parent=59 // pred_region
          %s1475 = smul.u32 2, %s31
          %s1477 = ssub.s32 512, 512
          %1478 = vsyncadd %s1468, %s1477
          %s1479 = smul.addr %s1475, 2
          %s1480 = smul.addr %s1479, 128
          %s1481 = scalar_lea.hbm %s10, %s1480
          %s1482 = sshll.u32 %s1471, 4
          %s1483 = int_to_ptr.vmem [resolvable:$true] %s1482
          %1488 = dma.vmem_to_hbm [thread:$0]  %s1483, 512, %s1481, %s1468, 128, 128, 8
        $region80: #{tpu_custom_call.1} parent=59 // pred_fallthru
          _
      $region60: #{tpu_custom_call.1} parent=5 // pred_fallthru
        _
      %p1489 = scmp.le.s32.totalorder 2, %s26
      // Predicated region
      $region81: #{tpu_custom_call.1} parent=5 // pred_check
        %p1490 = pneg %p1489
      $region82: #{tpu_custom_call.1} parent=5 // pred_check_branch
        %1492 = sbr.rel (%p1490) target = $region84
      $region83: #{tpu_custom_call.1} parent=5 // pred_region
        %s1493 = ssub.s32 %s26, 2
        // Predicated region
        $region85: #{tpu_custom_call.1} parent=83 // pred_check
          %p1494 = pneg %p285
        $region86: #{tpu_custom_call.1} parent=83 // pred_check_branch
          %1496 = sbr.rel (%p1494) target = $region88
        $region87: #{tpu_custom_call.1} parent=83 // pred_region
          %s1497 = sand.u32 %s270, 1
          %s1498 = scalar_lea.sflag [#allocation4], %s1497
          %s1499 = sand.u32 %s270, 1
          %s1500 = smul.addr %s1499, 32
          %s1501 = scalar_lea.vmem [#allocation10], %s1500
          %1502 = dma.done %s1498, 512
        $region88: #{tpu_custom_call.1} parent=83 // pred_fallthru
          _
      $region84: #{tpu_custom_call.1} parent=5 // pred_fallthru
        _
    $region6: #{tpu_custom_call.1} parent=1 // loop_footer
      %s30 = sadd.s32 1, %s26
    $region7: #{tpu_custom_call.1} parent=1 // loop_footer_branch
      %25 = sbr.rel target = $region3
    $region8: #{tpu_custom_call.1} parent=1 // loop_exit
      _
    %1503 = vsyncpa [#allocation3], 1
    %s1504 = scalar_lea.sflag [#allocation3], 1
    %1505 = vsyncpa %s1504, 1
    %1506 = vsyncpa [#allocation6], 1
    %s1507 = scalar_lea.sflag [#allocation6], 1
    %1508 = vsyncpa %s1507, 1
    %1509 = vsyncpa [#allocation9], 1
    %1510 = vsyncpa [#allocation4], 1
    %s1511 = scalar_lea.sflag [#allocation4], 1
    %1512 = vsyncpa %s1511, 1

</llo_original>
